<compile_context>
chip_gen: v7x
topology: tpu7x:2x2x1
jax: 0.10.0
libtpu: 0.0.40
codegen_flags: <defaults>
</compile_context>

<pallas_src>
from functools import partial

import jax
import jax.numpy as jnp
from jax import lax
from jax.experimental import pallas as pl
from jax.experimental.pallas import tpu as pltpu

BN_EPS = 1e-5
LEAKY_SLOPE = 0.1
LANES = 128


def _round_up(x, m):
    return -(-x // m) * m


def conv_stats_kernel(p_ref, w_ref, conv_ref, sum_ref, sq_ref):
    """Pass 1: conv matmul for this M tile; store the tile and its partial stats."""
    conv = jnp.dot(p_ref[...], w_ref[...], preferred_element_type=jnp.float32)
    conv_ref[...] = conv
    sum_ref[...] = jnp.sum(conv, axis=0, keepdims=True)[None]          # (1,1,ocp)
    sq_ref[...] = jnp.sum(conv * conv, axis=0, keepdims=True)[None]    # (1,1,ocp)


def bn_act_kernel(c_ref, scale_ref, shift_ref, o_ref):
    """Pass 2: folded BN (one FMA) + LeakyReLU, elementwise over the conv buffer."""
    y = c_ref[...] * scale_ref[...] + shift_ref[...]
    o_ref[...] = jnp.where(y > 0, y, LEAKY_SLOPE * y).astype(o_ref.dtype)


@partial(jax.jit, static_argnums=(5, 6))
def convolutional_forward(x_nchw, w, b, gamma, beta, stride, padding):
    """x_nchw: (N, C, H, W); w: (OC, C, KH, KW) (PyTorch conv layout)."""
    N, C, H, W = x_nchw.shape
    OC, _, KH, KW = w.shape
    OH = (H + 2 * padding - KH) // stride + 1
    OW = (W + 2 * padding - KW) // stride + 1
    M = N * OH * OW
    K = KH * KW * C

    # --- glue: NCHW -> NHWC, pad, im2col (see TODO at top) ---
    x = jnp.transpose(x_nchw, (0, 2, 3, 1))
    xp = jnp.pad(x, ((0, 0), (padding, padding), (padding, padding), (0, 0)))
    cols = []
    for ki in range(KH):
        for kj in range(KW):
            cols.append(
                xp[:, ki:ki + stride * OH:stride, kj:kj + stride * OW:stride, :]
            )
    patches = jnp.concatenate(cols, axis=-1).reshape(M, K).astype(jnp.float32)

    # K padded to a multiple of 8 (aligned sublanes for the (K, OC) weight tile;
    # zero rows/cols are numerically free).
    K_pad = _round_up(K, 8)
    wmat = jnp.transpose(w, (2, 3, 1, 0)).reshape(K, OC).astype(jnp.float32)
    if K_pad != K:
        patches = jnp.pad(patches, ((0, 0), (0, K_pad - K)))
        wmat = jnp.pad(wmat, ((0, K_pad - K), (0, 0)))

    # Output-channel width: no lane padding for small OC (avoids up to 16x HBM
    # write amplification on the mem-bound passes); round to 128 when OC > 128.
    ocp = _round_up(OC, LANES) if OC > LANES else OC
    if ocp != OC:
        wmat = jnp.pad(wmat, ((0, 0), (0, ocp - OC)))

    # Conv bias dropped: a per-channel bias before train-mode BN is cancelled
    # exactly by the mean subtraction, so it never needs to enter the kernel.
    del b

    # ---- M tiling: big tiles (low per-step overhead) but clamped for small M ----
    tm_target = 2048 if K_pad <= 64 else 1024
    tm = min(tm_target, _round_up(M, 256))
    num_tiles = -(-M // tm)
    m_pad = num_tiles * tm
    if m_pad != M:
        # Zero rows contribute 0 to sum/sumsq; stats divide by the true M below.
        patches = jnp.pad(patches, ((0, m_pad - M), (0, 0)))

    # Explicit VMEM budget (double-buffered f32 tiles), clamped to v7x's 64 MiB.
    tile_bytes = 4 * (tm * K_pad + K_pad * ocp + 2 * tm * ocp + 2 * ocp)
    vmem_limit = int(min(max(3 * tile_bytes, 32 << 20), 64 << 20))

    # ---- pass 1: conv matmul once per tile + per-tile partial stats ----
    conv_buf, sums, sqs = pl.pallas_call(
        conv_stats_kernel,
        out_shape=(jax.ShapeDtypeStruct((m_pad, ocp), jnp.float32),
                   jax.ShapeDtypeStruct((num_tiles, 1, ocp), jnp.float32),
                   jax.ShapeDtypeStruct((num_tiles, 1, ocp), jnp.float32)),
        grid=(num_tiles,),
        in_specs=[
            pl.BlockSpec((tm, K_pad), lambda i: (i, 0)),
            pl.BlockSpec((K_pad, ocp), lambda i: (0, 0)),
        ],
        out_specs=(pl.BlockSpec((tm, ocp), lambda i: (i, 0)),
                   pl.BlockSpec((1, 1, ocp), lambda i: (i, 0, 0)),
                   pl.BlockSpec((1, 1, ocp), lambda i: (i, 0, 0))),
        compiler_params=pltpu.CompilerParams(
            dimension_semantics=("parallel",),     # megacore-shardable on v7x
            vmem_limit_bytes=vmem_limit),
    )(patches, wmat)

    # ---- fold BN into one scale/shift per channel (tiny host-side math) ----
    # TODO(synk): Welford/centered accumulation if very large M makes f32
    # E[x^2]-E[x]^2 cancellation exceed the accuracy budget.
    inv_m = 1.0 / float(M)                          # divide by TRUE element count
    sum_c = jnp.sum(sums[:, 0, :], axis=0)
    sq_c = jnp.sum(sqs[:, 0, :], axis=0)
    mean = sum_c * inv_m
    var = jnp.maximum(sq_c * inv_m - mean * mean, 0.0)
    gvec = gamma.astype(jnp.float32)
    bvec = beta.astype(jnp.float32)
    if ocp != OC:
        gvec = jnp.pad(gvec, (0, ocp - OC))
        bvec = jnp.pad(bvec, (0, ocp - OC))
    scale = (gvec * lax.rsqrt(var + BN_EPS)).reshape(1, ocp)
    shift = (bvec.reshape(1, ocp) - mean.reshape(1, ocp) * scale)

    # ---- pass 2: elementwise BN + LeakyReLU, in place over the conv buffer ----
    out_flat = pl.pallas_call(
        bn_act_kernel,
        out_shape=jax.ShapeDtypeStruct((m_pad, ocp), jnp.float32),
        grid=(num_tiles,),
        in_specs=[
            pl.BlockSpec((tm, ocp), lambda i: (i, 0)),
            pl.BlockSpec((1, ocp), lambda i: (0, 0)),
            pl.BlockSpec((1, ocp), lambda i: (0, 0)),
        ],
        out_specs=pl.BlockSpec((tm, ocp), lambda i: (i, 0)),
        input_output_aliases={0: 0},               # reuse conv_buf, no new HBM alloc
        compiler_params=pltpu.CompilerParams(
            dimension_semantics=("parallel",),
            vmem_limit_bytes=vmem_limit),
    )(conv_buf, scale, shift)

    # TODO(synk): skip the final transpose if the consumer accepts NHWC.
    out = out_flat[:M, :OC].reshape(N, OH, OW, OC)
    return jnp.transpose(out, (0, 3, 1, 2))         # back to NCHW


def reference_forward(x_nchw, w, b, gamma, beta, stride, padding):
    """Pure-JAX reference (matches PyTorch train-mode BN forward, incl. bias)."""
    conv = lax.conv_general_dilated(
        x_nchw, w, window_strides=(stride, stride),
        padding=((padding, padding), (padding, padding)),
        dimension_numbers=("NCHW", "OIHW", "NCHW"),
    ) + b[None, :, None, None]
    mean = jnp.mean(conv, axis=(0, 2, 3), keepdims=True)
    var = jnp.mean((conv - mean) ** 2, axis=(0, 2, 3), keepdims=True)
    y = (conv - mean) * lax.rsqrt(var + BN_EPS) * gamma[None, :, None, None] \
        + beta[None, :, None, None]
    return jnp.where(y > 0, y, LEAKY_SLOPE * y)


if __name__ == "__main__":
    in_ch, out_ch, k_size, s, p = 4, 8, 3, 1, 1
    N, H, W = 2, 16, 16

    key = jax.random.PRNGKey(0)
    kx, kw, kb, kg, kbeta = jax.random.split(key, 5)
    x = jax.random.normal(kx, (N, in_ch, H, W), dtype=jnp.float32)
    w = 0.1 * jax.random.normal(kw, (out_ch, in_ch, k_size, k_size), dtype=jnp.float32)
    b = 0.1 * jax.random.normal(kb, (out_ch,), dtype=jnp.float32)
    gamma = 1.0 + 0.05 * jax.random.normal(kg, (out_ch,), dtype=jnp.float32)
    beta = 0.05 * jax.random.normal(kbeta, (out_ch,), dtype=jnp.float32)

    out = convolutional_forward(x, w, b, gamma, beta, s, p)
    out = jax.block_until_ready(out)

    ref = reference_forward(x, w, b, gamma, beta, s, p)
    assert out.shape == (N, out_ch, H, W), out.shape
    assert jnp.allclose(out, ref, atol=1e-4, rtol=1e-4), \
        float(jnp.max(jnp.abs(out - ref)))

    print("KERNEL_OK")
</pallas_src>

<mosaic_0001>
module attributes {stable_mosaic.version = 11 : i64} {
  func.func @conv_stats_kernel(%arg0: i32, %arg1: memref<512x40xf32, #tpu.memory_space<vmem>>, %arg2: memref<40x8xf32, #tpu.memory_space<vmem>>, %arg3: memref<512x8xf32, #tpu.memory_space<vmem>>, %arg4: memref<1x1x8xf32, #tpu.memory_space<vmem>>, %arg5: memref<1x1x8xf32, #tpu.memory_space<vmem>>) attributes {dimension_semantics = [#tpu.dimension_semantics<parallel>], iteration_bounds = array<i64: 1>, scalar_prefetch = 0 : i64, scratch_operands = 0 : i64, tpu.core_type = #tpu.core_type<tc>, window_params = [{transform_indices = @transform_0, window_bounds = array<i64: 512, 40>}, {pipeline_mode = #tpu.pipeline_mode<synchronous>, transform_indices = @transform_1, window_bounds = array<i64: 40, 8>}, {transform_indices = @transform_2, window_bounds = array<i64: 512, 8>}, {transform_indices = @transform_3, window_bounds = array<i64: 1, 1, 8>}, {transform_indices = @transform_4, window_bounds = array<i64: 1, 1, 8>}]} {
    %c0 = arith.constant 0 : index
    %c0_0 = arith.constant 0 : index
    %0 = vector.load %arg1[%c0, %c0_0] : memref<512x40xf32, #tpu.memory_space<vmem>>, vector<512x40xf32>
    %c0_1 = arith.constant 0 : index
    %c0_2 = arith.constant 0 : index
    %1 = vector.load %arg2[%c0_1, %c0_2] : memref<40x8xf32, #tpu.memory_space<vmem>>, vector<40x8xf32>
    %cst = arith.constant dense<0.000000e+00> : vector<512x8xf32>
    %2 = tpu.matmul %0, %1, %cst {dimension_numbers = #tpu.dot_dimension_numbers<[1], [0], [0], [1], [0, 0, 1, 1], [], []>} : vector<512x40xf32>, vector<40x8xf32>, vector<512x8xf32> -> vector<512x8xf32>
    %c0_3 = arith.constant 0 : index
    %c0_4 = arith.constant 0 : index
    %3 = vector.load %arg3[%c0_3, %c0_4] : memref<512x8xf32, #tpu.memory_space<vmem>>, vector<512x8xf32>
    tpu.vector_store %arg3[%c0_3, %c0_4], %2 {strides = array<i32>} : memref<512x8xf32, #tpu.memory_space<vmem>>, vector<512x8xf32>,
    %cst_5 = arith.constant dense<0.000000e+00> : vector<8xf32>
    %4 = vector.multi_reduction <add>, %2, %cst_5 [0] : vector<512x8xf32> to vector<8xf32>
    %5 = vector.shape_cast %4 : vector<8xf32> to vector<1x8xf32>
    %6 = vector.shape_cast %5 : vector<1x8xf32> to vector<1x1x8xf32>
    %c0_6 = arith.constant 0 : index
    %c0_7 = arith.constant 0 : index
    %c0_8 = arith.constant 0 : index
    %7 = vector.load %arg4[%c0_6, %c0_7, %c0_8] : memref<1x1x8xf32, #tpu.memory_space<vmem>>, vector<1x1x8xf32>
    tpu.vector_store %arg4[%c0_6, %c0_7, %c0_8], %6 {strides = array<i32>} : memref<1x1x8xf32, #tpu.memory_space<vmem>>, vector<1x1x8xf32>,
    %8 = arith.mulf %2, %2 : vector<512x8xf32>
    %cst_9 = arith.constant dense<0.000000e+00> : vector<8xf32>
    %9 = vector.multi_reduction <add>, %8, %cst_9 [0] : vector<512x8xf32> to vector<8xf32>
    %10 = vector.shape_cast %9 : vector<8xf32> to vector<1x8xf32>
    %11 = vector.shape_cast %10 : vector<1x8xf32> to vector<1x1x8xf32>
    %c0_10 = arith.constant 0 : index
    %c0_11 = arith.constant 0 : index
    %c0_12 = arith.constant 0 : index
    %12 = vector.load %arg5[%c0_10, %c0_11, %c0_12] : memref<1x1x8xf32, #tpu.memory_space<vmem>>, vector<1x1x8xf32>
    tpu.vector_store %arg5[%c0_10, %c0_11, %c0_12], %11 {strides = array<i32>} : memref<1x1x8xf32, #tpu.memory_space<vmem>>, vector<1x1x8xf32>,
    return
  }
  func.func @transform_0(%arg0: i32) -> (i32, i32) {
    %c0_i32 = arith.constant 0 : i32
    %c0_i32_0 = arith.constant 0 : i32
    return %arg0, %c0_i32 : i32, i32
  }
  func.func @transform_1(%arg0: i32) -> (i32, i32) {
    %c0_i32 = arith.constant 0 : i32
    %c0_i32_0 = arith.constant 0 : i32
    %c0_i32_1 = arith.constant 0 : i32
    return %c0_i32, %c0_i32_0 : i32, i32
  }
  func.func @transform_2(%arg0: i32) -> (i32, i32) {
    %c0_i32 = arith.constant 0 : i32
    %c0_i32_0 = arith.constant 0 : i32
    return %arg0, %c0_i32 : i32, i32
  }
  func.func @transform_3(%arg0: i32) -> (i32, i32, i32) {
    %c0_i32 = arith.constant 0 : i32
    %c0_i32_0 = arith.constant 0 : i32
    %c0_i32_1 = arith.constant 0 : i32
    return %arg0, %c0_i32, %c0_i32_0 : i32, i32, i32
  }
  func.func @transform_4(%arg0: i32) -> (i32, i32, i32) {
    %c0_i32 = arith.constant 0 : i32
    %c0_i32_0 = arith.constant 0 : i32
    %c0_i32_1 = arith.constant 0 : i32
    return %arg0, %c0_i32, %c0_i32_0 : i32, i32, i32
  }
}

module attributes {stable_mosaic.version = 11 : i64} {
  func.func @bn_act_kernel(%arg0: i32, %arg1: memref<512x8xf32, #tpu.memory_space<vmem>>, %arg2: memref<1x8xf32, #tpu.memory_space<vmem>>, %arg3: memref<1x8xf32, #tpu.memory_space<vmem>>, %arg4: memref<512x8xf32, #tpu.memory_space<vmem>>) attributes {dimension_semantics = [#tpu.dimension_semantics<parallel>], iteration_bounds = array<i64: 1>, scalar_prefetch = 0 : i64, scratch_operands = 0 : i64, tpu.core_type = #tpu.core_type<tc>, window_params = [{transform_indices = @transform_0, window_bounds = array<i64: 512, 8>}, {pipeline_mode = #tpu.pipeline_mode<synchronous>, transform_indices = @transform_1, window_bounds = array<i64: 1, 8>}, {pipeline_mode = #tpu.pipeline_mode<synchronous>, transform_indices = @transform_2, window_bounds = array<i64: 1, 8>}, {transform_indices = @transform_3, window_bounds = array<i64: 512, 8>}]} {
    %c0 = arith.constant 0 : index
    %c0_0 = arith.constant 0 : index
    %0 = vector.load %arg1[%c0, %c0_0] : memref<512x8xf32, #tpu.memory_space<vmem>>, vector<512x8xf32>
    %c0_1 = arith.constant 0 : index
    %c0_2 = arith.constant 0 : index
    %1 = vector.load %arg2[%c0_1, %c0_2] : memref<1x8xf32, #tpu.memory_space<vmem>>, vector<1x8xf32>
    %2 = vector.broadcast %1 : vector<1x8xf32> to vector<512x8xf32>
    %3 = arith.mulf %0, %2 : vector<512x8xf32>
    %c0_3 = arith.constant 0 : index
    %c0_4 = arith.constant 0 : index
    %4 = vector.load %arg3[%c0_3, %c0_4] : memref<1x8xf32, #tpu.memory_space<vmem>>, vector<1x8xf32>
    %5 = vector.broadcast %4 : vector<1x8xf32> to vector<512x8xf32>
    %6 = arith.addf %3, %5 : vector<512x8xf32>
    %cst = arith.constant 0.000000e+00 : f32
    %7 = vector.broadcast %cst : f32 to vector<512x8xf32>
    %8 = arith.cmpf ogt, %6, %7 : vector<512x8xf32>
    %cst_5 = arith.constant 1.000000e-01 : f32
    %9 = vector.broadcast %cst_5 : f32 to vector<512x8xf32>
    %10 = arith.mulf %9, %6 : vector<512x8xf32>
    %11 = arith.select %8, %6, %10 : vector<512x8xi1>, vector<512x8xf32>
    %c0_6 = arith.constant 0 : index
    %c0_7 = arith.constant 0 : index
    %12 = vector.load %arg4[%c0_6, %c0_7] : memref<512x8xf32, #tpu.memory_space<vmem>>, vector<512x8xf32>
    tpu.vector_store %arg4[%c0_6, %c0_7], %11 {strides = array<i32>} : memref<512x8xf32, #tpu.memory_space<vmem>>, vector<512x8xf32>,
    return
  }
  func.func @transform_0(%arg0: i32) -> (i32, i32) {
    %c0_i32 = arith.constant 0 : i32
    %c0_i32_0 = arith.constant 0 : i32
    return %arg0, %c0_i32 : i32, i32
  }
  func.func @transform_1(%arg0: i32) -> (i32, i32) {
    %c0_i32 = arith.constant 0 : i32
    %c0_i32_0 = arith.constant 0 : i32
    %c0_i32_1 = arith.constant 0 : i32
    return %c0_i32, %c0_i32_0 : i32, i32
  }
  func.func @transform_2(%arg0: i32) -> (i32, i32) {
    %c0_i32 = arith.constant 0 : i32
    %c0_i32_0 = arith.constant 0 : i32
    %c0_i32_1 = arith.constant 0 : i32
    return %c0_i32, %c0_i32_0 : i32, i32
  }
  func.func @transform_3(%arg0: i32) -> (i32, i32) {
    %c0_i32 = arith.constant 0 : i32
    %c0_i32_0 = arith.constant 0 : i32
    return %arg0, %c0_i32 : i32, i32
  }
}

</mosaic_0001>

<llo_original>
// kernel: convolutional_forward.3
$region0: #{convolutional_forward.3}
  #allocation0 [shape = 'u32[]', space=smem, size = 0x4, offset = 0x4, fixed_abs, tag = 'smem constant byte address 0x4 - core index']
  #allocation1 [shape = 'u32[144,128]{1,0:T(1,128)}', space=vmem, size = 0x12000, scoped, tag = 'internal scratch']
  %s0 = inlined_call_operand.vmem [shape: f32[512,8], index: 0, kind: input, shape index: {}, may-alias: {0,3}]
  %s1 = inlined_call_operand.vmem [shape: f32[1,8], index: 1, kind: input, shape index: {}]
  %s2 = inlined_call_operand.vmem [shape: f32[1,8], index: 2, kind: input, shape index: {}]
  %s3 = inlined_call_operand.vmem [shape: f32[512,8], index: 3, kind: output, shape index: {}, may-alias: {0,3}]
  %s4 = sld [smem:[#allocation0]]
  $region22: #{convolutional_forward.3} parent=0
    _
  %s6 = ssub.s32 1, %s4
  %s7 = scalar_select 0, %s6, %s4
  // Predicated region
  $region2: #{convolutional_forward.3} parent=0 // pred_check
    _
  $region3: #{convolutional_forward.3} parent=0 // pred_check_branch
    %9 = sbr.rel (0) target = $region5
  $region4: #{convolutional_forward.3} parent=0 // pred_region
    _
  $region5: #{convolutional_forward.3} parent=0 // pred_fallthru
    _
  // Predicated region
  $region6: #{convolutional_forward.3} parent=0 // pred_check
    _
  $region7: #{convolutional_forward.3} parent=0 // pred_check_branch
    %11 = sbr.rel (0) target = $region9
  $region8: #{convolutional_forward.3} parent=0 // pred_region
    _
  $region9: #{convolutional_forward.3} parent=0 // pred_fallthru
    _
  // Predicated region
  $region10: #{convolutional_forward.3} parent=0 // pred_check
    _
  $region11: #{convolutional_forward.3} parent=0 // pred_check_branch
    %13 = sbr.rel (0) target = $region13
  $region12: #{convolutional_forward.3} parent=0 // pred_region
    _
  $region13: #{convolutional_forward.3} parent=0 // pred_fallthru
    _
  %v14 = vld [vmem:[%s0] sm:$0xff]
  %v15 = vld [vmem:[%s0 + $0x8] sm:$0xff]
  %v16 = vld [vmem:[%s0 + $0x10] sm:$0xff]
  %v17 = vld [vmem:[%s0 + $0x18] sm:$0xff]
  %v18 = vld [vmem:[%s0 + $0x20] sm:$0xff]
  %v19 = vld [vmem:[%s0 + $0x28] sm:$0xff]
  %v20 = vld [vmem:[%s0 + $0x30] sm:$0xff]
  %v21 = vld [vmem:[%s0 + $0x38] sm:$0xff]
  %v22 = vld [vmem:[%s0 + $0x40] sm:$0xff]
  %v23 = vld [vmem:[%s0 + $0x48] sm:$0xff]
  %v24 = vld [vmem:[%s0 + $0x50] sm:$0xff]
  %v25 = vld [vmem:[%s0 + $0x58] sm:$0xff]
  %v26 = vld [vmem:[%s0 + $0x60] sm:$0xff]
  %v27 = vld [vmem:[%s0 + $0x68] sm:$0xff]
  %v28 = vld [vmem:[%s0 + $0x70] sm:$0xff]
  %v29 = vld [vmem:[%s0 + $0x78] sm:$0xff]
  %v30 = vld [vmem:[%s0 + $0x80] sm:$0xff]
  %v31 = vld [vmem:[%s0 + $0x88] sm:$0xff]
  %v32 = vld [vmem:[%s0 + $0x90] sm:$0xff]
  %v33 = vld [vmem:[%s0 + $0x98] sm:$0xff]
  %v34 = vld [vmem:[%s0 + $0xa0] sm:$0xff]
  %v35 = vld [vmem:[%s0 + $0xa8] sm:$0xff]
  %v36 = vld [vmem:[%s0 + $0xb0] sm:$0xff]
  %v37 = vld [vmem:[%s0 + $0xb8] sm:$0xff]
  %v38 = vld [vmem:[%s0 + $0xc0] sm:$0xff]
  %v39 = vld [vmem:[%s0 + $0xc8] sm:$0xff]
  %v40 = vld [vmem:[%s0 + $0xd0] sm:$0xff]
  %v41 = vld [vmem:[%s0 + $0xd8] sm:$0xff]
  %v42 = vld [vmem:[%s0 + $0xe0] sm:$0xff]
  %v43 = vld [vmem:[%s0 + $0xe8] sm:$0xff]
  %v44 = vld [vmem:[%s0 + $0xf0] sm:$0xff]
  %v45 = vld [vmem:[%s0 + $0xf8] sm:$0xff]
  %v46 = vld [vmem:[%s0 + $0x100] sm:$0xff]
  %v47 = vld [vmem:[%s0 + $0x108] sm:$0xff]
  %v48 = vld [vmem:[%s0 + $0x110] sm:$0xff]
  %v49 = vld [vmem:[%s0 + $0x118] sm:$0xff]
  %v50 = vld [vmem:[%s0 + $0x120] sm:$0xff]
  %v51 = vld [vmem:[%s0 + $0x128] sm:$0xff]
  %v52 = vld [vmem:[%s0 + $0x130] sm:$0xff]
  %v53 = vld [vmem:[%s0 + $0x138] sm:$0xff]
  %v54 = vld [vmem:[%s0 + $0x140] sm:$0xff]
  %v55 = vld [vmem:[%s0 + $0x148] sm:$0xff]
  %v56 = vld [vmem:[%s0 + $0x150] sm:$0xff]
  %v57 = vld [vmem:[%s0 + $0x158] sm:$0xff]
  %v58 = vld [vmem:[%s0 + $0x160] sm:$0xff]
  %v59 = vld [vmem:[%s0 + $0x168] sm:$0xff]
  %v60 = vld [vmem:[%s0 + $0x170] sm:$0xff]
  %v61 = vld [vmem:[%s0 + $0x178] sm:$0xff]
  %v62 = vld [vmem:[%s0 + $0x180] sm:$0xff]
  %v63 = vld [vmem:[%s0 + $0x188] sm:$0xff]
  %v64 = vld [vmem:[%s0 + $0x190] sm:$0xff]
  %v65 = vld [vmem:[%s0 + $0x198] sm:$0xff]
  %v66 = vld [vmem:[%s0 + $0x1a0] sm:$0xff]
  %v67 = vld [vmem:[%s0 + $0x1a8] sm:$0xff]
  %v68 = vld [vmem:[%s0 + $0x1b0] sm:$0xff]
  %v69 = vld [vmem:[%s0 + $0x1b8] sm:$0xff]
  %v70 = vld [vmem:[%s0 + $0x1c0] sm:$0xff]
  %v71 = vld [vmem:[%s0 + $0x1c8] sm:$0xff]
  %v72 = vld [vmem:[%s0 + $0x1d0] sm:$0xff]
  %v73 = vld [vmem:[%s0 + $0x1d8] sm:$0xff]
  %v74 = vld [vmem:[%s0 + $0x1e0] sm:$0xff]
  %v75 = vld [vmem:[%s0 + $0x1e8] sm:$0xff]
  %v76 = vld [vmem:[%s0 + $0x1f0] sm:$0xff]
  %v77 = vld [vmem:[%s0 + $0x1f8] sm:$0xff]
  %v78 = vld [vmem:[%s1] sm:$0x1]
  %v80 = vlaneseq
  %v81 = vshrl.u32 %v80, 7
  %v82 = vsub.s32 0, %v81
  %v83 = vrot.slane %v78, %v82
  %v85 = vmul.f32 %v14, %v83
  %v86 = vmul.f32 %v15, %v83
  %v87 = vmul.f32 %v16, %v83
  %v88 = vmul.f32 %v17, %v83
  %v89 = vmul.f32 %v18, %v83
  %v90 = vmul.f32 %v19, %v83
  %v91 = vmul.f32 %v20, %v83
  %v92 = vmul.f32 %v21, %v83
  %v93 = vmul.f32 %v22, %v83
  %v94 = vmul.f32 %v23, %v83
  %v95 = vmul.f32 %v24, %v83
  %v96 = vmul.f32 %v25, %v83
  %v97 = vmul.f32 %v26, %v83
  %v98 = vmul.f32 %v27, %v83
  %v99 = vmul.f32 %v28, %v83
  %v100 = vmul.f32 %v29, %v83
  %v101 = vmul.f32 %v30, %v83
  %v102 = vmul.f32 %v31, %v83
  %v103 = vmul.f32 %v32, %v83
  %v104 = vmul.f32 %v33, %v83
  %v105 = vmul.f32 %v34, %v83
  %v106 = vmul.f32 %v35, %v83
  %v107 = vmul.f32 %v36, %v83
  %v108 = vmul.f32 %v37, %v83
  %v109 = vmul.f32 %v38, %v83
  %v110 = vmul.f32 %v39, %v83
  %v111 = vmul.f32 %v40, %v83
  %v112 = vmul.f32 %v41, %v83
  %v113 = vmul.f32 %v42, %v83
  %v114 = vmul.f32 %v43, %v83
  %v115 = vmul.f32 %v44, %v83
  %v116 = vmul.f32 %v45, %v83
  %v117 = vmul.f32 %v46, %v83
  %v118 = vmul.f32 %v47, %v83
  %v119 = vmul.f32 %v48, %v83
  %v120 = vmul.f32 %v49, %v83
  %v121 = vmul.f32 %v50, %v83
  %v122 = vmul.f32 %v51, %v83
  %v123 = vmul.f32 %v52, %v83
  %v124 = vmul.f32 %v53, %v83
  %v125 = vmul.f32 %v54, %v83
  %v126 = vmul.f32 %v55, %v83
  %v127 = vmul.f32 %v56, %v83
  %v128 = vmul.f32 %v57, %v83
  %v129 = vmul.f32 %v58, %v83
  %v130 = vmul.f32 %v59, %v83
  %v131 = vmul.f32 %v60, %v83
  %v132 = vmul.f32 %v61, %v83
  %v133 = vmul.f32 %v62, %v83
  %v134 = vmul.f32 %v63, %v83
  %v135 = vmul.f32 %v64, %v83
  %v136 = vmul.f32 %v65, %v83
  %v137 = vmul.f32 %v66, %v83
  %v138 = vmul.f32 %v67, %v83
  %v139 = vmul.f32 %v68, %v83
  %v140 = vmul.f32 %v69, %v83
  %v141 = vmul.f32 %v70, %v83
  %v142 = vmul.f32 %v71, %v83
  %v143 = vmul.f32 %v72, %v83
  %v144 = vmul.f32 %v73, %v83
  %v145 = vmul.f32 %v74, %v83
  %v146 = vmul.f32 %v75, %v83
  %v147 = vmul.f32 %v76, %v83
  %v148 = vmul.f32 %v77, %v83
  %v149 = vld [vmem:[%s2] sm:$0x1]
  %v151 = vlaneseq
  %v152 = vshrl.u32 %v151, 7
  %v153 = vsub.s32 0, %v152
  %v154 = vrot.slane %v149, %v153
  %v156 = vadd.f32 %v85, %v154
  %v157 = vadd.f32 %v86, %v154
  %v158 = vadd.f32 %v87, %v154
  %v159 = vadd.f32 %v88, %v154
  %v160 = vadd.f32 %v89, %v154
  %v161 = vadd.f32 %v90, %v154
  %v162 = vadd.f32 %v91, %v154
  %v163 = vadd.f32 %v92, %v154
  %v164 = vadd.f32 %v93, %v154
  %v165 = vadd.f32 %v94, %v154
  %v166 = vadd.f32 %v95, %v154
  %v167 = vadd.f32 %v96, %v154
  %v168 = vadd.f32 %v97, %v154
  %v169 = vadd.f32 %v98, %v154
  %v170 = vadd.f32 %v99, %v154
  %v171 = vadd.f32 %v100, %v154
  %v172 = vadd.f32 %v101, %v154
  %v173 = vadd.f32 %v102, %v154
  %v174 = vadd.f32 %v103, %v154
  %v175 = vadd.f32 %v104, %v154
  %v176 = vadd.f32 %v105, %v154
  %v177 = vadd.f32 %v106, %v154
  %v178 = vadd.f32 %v107, %v154
  %v179 = vadd.f32 %v108, %v154
  %v180 = vadd.f32 %v109, %v154
  %v181 = vadd.f32 %v110, %v154
  %v182 = vadd.f32 %v111, %v154
  %v183 = vadd.f32 %v112, %v154
  %v184 = vadd.f32 %v113, %v154
  %v185 = vadd.f32 %v114, %v154
  %v186 = vadd.f32 %v115, %v154
  %v187 = vadd.f32 %v116, %v154
  %v188 = vadd.f32 %v117, %v154
  %v189 = vadd.f32 %v118, %v154
  %v190 = vadd.f32 %v119, %v154
  %v191 = vadd.f32 %v120, %v154
  %v192 = vadd.f32 %v121, %v154
  %v193 = vadd.f32 %v122, %v154
  %v194 = vadd.f32 %v123, %v154
  %v195 = vadd.f32 %v124, %v154
  %v196 = vadd.f32 %v125, %v154
  %v197 = vadd.f32 %v126, %v154
  %v198 = vadd.f32 %v127, %v154
  %v199 = vadd.f32 %v128, %v154
  %v200 = vadd.f32 %v129, %v154
  %v201 = vadd.f32 %v130, %v154
  %v202 = vadd.f32 %v131, %v154
  %v203 = vadd.f32 %v132, %v154
  %v204 = vadd.f32 %v133, %v154
  %v205 = vadd.f32 %v134, %v154
  %v206 = vadd.f32 %v135, %v154
  %v207 = vadd.f32 %v136, %v154
  %v208 = vadd.f32 %v137, %v154
  %v209 = vadd.f32 %v138, %v154
  %v210 = vadd.f32 %v139, %v154
  %v211 = vadd.f32 %v140, %v154
  %v212 = vadd.f32 %v141, %v154
  %v213 = vadd.f32 %v142, %v154
  %v214 = vadd.f32 %v143, %v154
  %v215 = vadd.f32 %v144, %v154
  %v216 = vadd.f32 %v145, %v154
  %v217 = vadd.f32 %v146, %v154
  %v218 = vadd.f32 %v147, %v154
  %v219 = vadd.f32 %v148, %v154
  %vm220 = vcmp.gt.f32.partialorder %v156, 0.0
  %vm221 = vcmp.gt.f32.partialorder %v157, 0.0
  %vm222 = vcmp.gt.f32.partialorder %v158, 0.0
  %vm223 = vcmp.gt.f32.partialorder %v159, 0.0
  %vm224 = vcmp.gt.f32.partialorder %v160, 0.0
  %vm225 = vcmp.gt.f32.partialorder %v161, 0.0
  %vm226 = vcmp.gt.f32.partialorder %v162, 0.0
  %vm227 = vcmp.gt.f32.partialorder %v163, 0.0
  %vm228 = vcmp.gt.f32.partialorder %v164, 0.0
  %vm229 = vcmp.gt.f32.partialorder %v165, 0.0
  %vm230 = vcmp.gt.f32.partialorder %v166, 0.0
  %vm231 = vcmp.gt.f32.partialorder %v167, 0.0
  %vm232 = vcmp.gt.f32.partialorder %v168, 0.0
  %vm233 = vcmp.gt.f32.partialorder %v169, 0.0
  %vm234 = vcmp.gt.f32.partialorder %v170, 0.0
  %vm235 = vcmp.gt.f32.partialorder %v171, 0.0
  %vm236 = vcmp.gt.f32.partialorder %v172, 0.0
  %vm237 = vcmp.gt.f32.partialorder %v173, 0.0
  %vm238 = vcmp.gt.f32.partialorder %v174, 0.0
  %vm239 = vcmp.gt.f32.partialorder %v175, 0.0
  %vm240 = vcmp.gt.f32.partialorder %v176, 0.0
  %vm241 = vcmp.gt.f32.partialorder %v177, 0.0
  %vm242 = vcmp.gt.f32.partialorder %v178, 0.0
  %vm243 = vcmp.gt.f32.partialorder %v179, 0.0
  %vm244 = vcmp.gt.f32.partialorder %v180, 0.0
  %vm245 = vcmp.gt.f32.partialorder %v181, 0.0
  %vm246 = vcmp.gt.f32.partialorder %v182, 0.0
  %vm247 = vcmp.gt.f32.partialorder %v183, 0.0
  %vm248 = vcmp.gt.f32.partialorder %v184, 0.0
  %vm249 = vcmp.gt.f32.partialorder %v185, 0.0
  %vm250 = vcmp.gt.f32.partialorder %v186, 0.0
  %vm251 = vcmp.gt.f32.partialorder %v187, 0.0
  %vm252 = vcmp.gt.f32.partialorder %v188, 0.0
  %vm253 = vcmp.gt.f32.partialorder %v189, 0.0
  %vm254 = vcmp.gt.f32.partialorder %v190, 0.0
  %vm255 = vcmp.gt.f32.partialorder %v191, 0.0
  %vm256 = vcmp.gt.f32.partialorder %v192, 0.0
  %vm257 = vcmp.gt.f32.partialorder %v193, 0.0
  %vm258 = vcmp.gt.f32.partialorder %v194, 0.0
  %vm259 = vcmp.gt.f32.partialorder %v195, 0.0
  %vm260 = vcmp.gt.f32.partialorder %v196, 0.0
  %vm261 = vcmp.gt.f32.partialorder %v197, 0.0
  %vm262 = vcmp.gt.f32.partialorder %v198, 0.0
  %vm263 = vcmp.gt.f32.partialorder %v199, 0.0
  %vm264 = vcmp.gt.f32.partialorder %v200, 0.0
  %vm265 = vcmp.gt.f32.partialorder %v201, 0.0
  %vm266 = vcmp.gt.f32.partialorder %v202, 0.0
  %vm267 = vcmp.gt.f32.partialorder %v203, 0.0
  %vm268 = vcmp.gt.f32.partialorder %v204, 0.0
  %vm269 = vcmp.gt.f32.partialorder %v205, 0.0
  %vm270 = vcmp.gt.f32.partialorder %v206, 0.0
  %vm271 = vcmp.gt.f32.partialorder %v207, 0.0
  %vm272 = vcmp.gt.f32.partialorder %v208, 0.0
  %vm273 = vcmp.gt.f32.partialorder %v209, 0.0
  %vm274 = vcmp.gt.f32.partialorder %v210, 0.0
  %vm275 = vcmp.gt.f32.partialorder %v211, 0.0
  %vm276 = vcmp.gt.f32.partialorder %v212, 0.0
  %vm277 = vcmp.gt.f32.partialorder %v213, 0.0
  %vm278 = vcmp.gt.f32.partialorder %v214, 0.0
  %vm279 = vcmp.gt.f32.partialorder %v215, 0.0
  %vm280 = vcmp.gt.f32.partialorder %v216, 0.0
  %vm281 = vcmp.gt.f32.partialorder %v217, 0.0
  %vm282 = vcmp.gt.f32.partialorder %v218, 0.0
  %vm283 = vcmp.gt.f32.partialorder %v219, 0.0
  %v284 = vmul.f32 %v156, 0.1
  %v285 = vmul.f32 %v157, 0.1
  %v286 = vmul.f32 %v158, 0.1
  %v287 = vmul.f32 %v159, 0.1
  %v288 = vmul.f32 %v160, 0.1
  %v289 = vmul.f32 %v161, 0.1
  %v290 = vmul.f32 %v162, 0.1
  %v291 = vmul.f32 %v163, 0.1
  %v292 = vmul.f32 %v164, 0.1
  %v293 = vmul.f32 %v165, 0.1
  %v294 = vmul.f32 %v166, 0.1
  %v295 = vmul.f32 %v167, 0.1
  %v296 = vmul.f32 %v168, 0.1
  %v297 = vmul.f32 %v169, 0.1
  %v298 = vmul.f32 %v170, 0.1
  %v299 = vmul.f32 %v171, 0.1
  %v300 = vmul.f32 %v172, 0.1
  %v301 = vmul.f32 %v173, 0.1
  %v302 = vmul.f32 %v174, 0.1
  %v303 = vmul.f32 %v175, 0.1
  %v304 = vmul.f32 %v176, 0.1
  %v305 = vmul.f32 %v177, 0.1
  %v306 = vmul.f32 %v178, 0.1
  %v307 = vmul.f32 %v179, 0.1
  %v308 = vmul.f32 %v180, 0.1
  %v309 = vmul.f32 %v181, 0.1
  %v310 = vmul.f32 %v182, 0.1
  %v311 = vmul.f32 %v183, 0.1
  %v312 = vmul.f32 %v184, 0.1
  %v313 = vmul.f32 %v185, 0.1
  %v314 = vmul.f32 %v186, 0.1
  %v315 = vmul.f32 %v187, 0.1
  %v316 = vmul.f32 %v188, 0.1
  %v317 = vmul.f32 %v189, 0.1
  %v318 = vmul.f32 %v190, 0.1
  %v319 = vmul.f32 %v191, 0.1
  %v320 = vmul.f32 %v192, 0.1
  %v321 = vmul.f32 %v193, 0.1
  %v322 = vmul.f32 %v194, 0.1
  %v323 = vmul.f32 %v195, 0.1
  %v324 = vmul.f32 %v196, 0.1
  %v325 = vmul.f32 %v197, 0.1
  %v326 = vmul.f32 %v198, 0.1
  %v327 = vmul.f32 %v199, 0.1
  %v328 = vmul.f32 %v200, 0.1
  %v329 = vmul.f32 %v201, 0.1
  %v330 = vmul.f32 %v202, 0.1
  %v331 = vmul.f32 %v203, 0.1
  %v332 = vmul.f32 %v204, 0.1
  %v333 = vmul.f32 %v205, 0.1
  %v334 = vmul.f32 %v206, 0.1
  %v335 = vmul.f32 %v207, 0.1
  %v336 = vmul.f32 %v208, 0.1
  %v337 = vmul.f32 %v209, 0.1
  %v338 = vmul.f32 %v210, 0.1
  %v339 = vmul.f32 %v211, 0.1
  %v340 = vmul.f32 %v212, 0.1
  %v341 = vmul.f32 %v213, 0.1
  %v342 = vmul.f32 %v214, 0.1
  %v343 = vmul.f32 %v215, 0.1
  %v344 = vmul.f32 %v216, 0.1
  %v345 = vmul.f32 %v217, 0.1
  %v346 = vmul.f32 %v218, 0.1
  %v347 = vmul.f32 %v219, 0.1
  %v348 = vsel %vm220, %v156, %v284
  %v349 = vsel %vm221, %v157, %v285
  %v350 = vsel %vm222, %v158, %v286
  %v351 = vsel %vm223, %v159, %v287
  %v352 = vsel %vm224, %v160, %v288
  %v353 = vsel %vm225, %v161, %v289
  %v354 = vsel %vm226, %v162, %v290
  %v355 = vsel %vm227, %v163, %v291
  %v356 = vsel %vm228, %v164, %v292
  %v357 = vsel %vm229, %v165, %v293
  %v358 = vsel %vm230, %v166, %v294
  %v359 = vsel %vm231, %v167, %v295
  %v360 = vsel %vm232, %v168, %v296
  %v361 = vsel %vm233, %v169, %v297
  %v362 = vsel %vm234, %v170, %v298
  %v363 = vsel %vm235, %v171, %v299
  %v364 = vsel %vm236, %v172, %v300
  %v365 = vsel %vm237, %v173, %v301
  %v366 = vsel %vm238, %v174, %v302
  %v367 = vsel %vm239, %v175, %v303
  %v368 = vsel %vm240, %v176, %v304
  %v369 = vsel %vm241, %v177, %v305
  %v370 = vsel %vm242, %v178, %v306
  %v371 = vsel %vm243, %v179, %v307
  %v372 = vsel %vm244, %v180, %v308
  %v373 = vsel %vm245, %v181, %v309
  %v374 = vsel %vm246, %v182, %v310
  %v375 = vsel %vm247, %v183, %v311
  %v376 = vsel %vm248, %v184, %v312
  %v377 = vsel %vm249, %v185, %v313
  %v378 = vsel %vm250, %v186, %v314
  %v379 = vsel %vm251, %v187, %v315
  %v380 = vsel %vm252, %v188, %v316
  %v381 = vsel %vm253, %v189, %v317
  %v382 = vsel %vm254, %v190, %v318
  %v383 = vsel %vm255, %v191, %v319
  %v384 = vsel %vm256, %v192, %v320
  %v385 = vsel %vm257, %v193, %v321
  %v386 = vsel %vm258, %v194, %v322
  %v387 = vsel %vm259, %v195, %v323
  %v388 = vsel %vm260, %v196, %v324
  %v389 = vsel %vm261, %v197, %v325
  %v390 = vsel %vm262, %v198, %v326
  %v391 = vsel %vm263, %v199, %v327
  %v392 = vsel %vm264, %v200, %v328
  %v393 = vsel %vm265, %v201, %v329
  %v394 = vsel %vm266, %v202, %v330
  %v395 = vsel %vm267, %v203, %v331
  %v396 = vsel %vm268, %v204, %v332
  %v397 = vsel %vm269, %v205, %v333
  %v398 = vsel %vm270, %v206, %v334
  %v399 = vsel %vm271, %v207, %v335
  %v400 = vsel %vm272, %v208, %v336
  %v401 = vsel %vm273, %v209, %v337
  %v402 = vsel %vm274, %v210, %v338
  %v403 = vsel %vm275, %v211, %v339
  %v404 = vsel %vm276, %v212, %v340
  %v405 = vsel %vm277, %v213, %v341
  %v406 = vsel %vm278, %v214, %v342
  %v407 = vsel %vm279, %v215, %v343
  %v408 = vsel %vm280, %v216, %v344
  %v409 = vsel %vm281, %v217, %v345
  %v410 = vsel %vm282, %v218, %v346
  %v411 = vsel %vm283, %v219, %v347
  %vm412 = vcmask 64512
  %413 = vst.msk [vmem:[%s3] sm:$0xff] %vm412, %v348
  %414 = vst.msk [vmem:[%s3 + $0x8] sm:$0xff] %vm412, %v349
  %415 = vst.msk [vmem:[%s3 + $0x10] sm:$0xff] %vm412, %v350
  %416 = vst.msk [vmem:[%s3 + $0x18] sm:$0xff] %vm412, %v351
  %417 = vst.msk [vmem:[%s3 + $0x20] sm:$0xff] %vm412, %v352
  %418 = vst.msk [vmem:[%s3 + $0x28] sm:$0xff] %vm412, %v353
  %419 = vst.msk [vmem:[%s3 + $0x30] sm:$0xff] %vm412, %v354
  %420 = vst.msk [vmem:[%s3 + $0x38] sm:$0xff] %vm412, %v355
  %421 = vst.msk [vmem:[%s3 + $0x40] sm:$0xff] %vm412, %v356
  %422 = vst.msk [vmem:[%s3 + $0x48] sm:$0xff] %vm412, %v357
  %423 = vst.msk [vmem:[%s3 + $0x50] sm:$0xff] %vm412, %v358
  %424 = vst.msk [vmem:[%s3 + $0x58] sm:$0xff] %vm412, %v359
  %425 = vst.msk [vmem:[%s3 + $0x60] sm:$0xff] %vm412, %v360
  %426 = vst.msk [vmem:[%s3 + $0x68] sm:$0xff] %vm412, %v361
  %427 = vst.msk [vmem:[%s3 + $0x70] sm:$0xff] %vm412, %v362
  %428 = vst.msk [vmem:[%s3 + $0x78] sm:$0xff] %vm412, %v363
  %429 = vst.msk [vmem:[%s3 + $0x80] sm:$0xff] %vm412, %v364
  %430 = vst.msk [vmem:[%s3 + $0x88] sm:$0xff] %vm412, %v365
  %431 = vst.msk [vmem:[%s3 + $0x90] sm:$0xff] %vm412, %v366
  %432 = vst.msk [vmem:[%s3 + $0x98] sm:$0xff] %vm412, %v367
  %433 = vst.msk [vmem:[%s3 + $0xa0] sm:$0xff] %vm412, %v368
  %434 = vst.msk [vmem:[%s3 + $0xa8] sm:$0xff] %vm412, %v369
  %435 = vst.msk [vmem:[%s3 + $0xb0] sm:$0xff] %vm412, %v370
  %436 = vst.msk [vmem:[%s3 + $0xb8] sm:$0xff] %vm412, %v371
  %437 = vst.msk [vmem:[%s3 + $0xc0] sm:$0xff] %vm412, %v372
  %438 = vst.msk [vmem:[%s3 + $0xc8] sm:$0xff] %vm412, %v373
  %439 = vst.msk [vmem:[%s3 + $0xd0] sm:$0xff] %vm412, %v374
  %440 = vst.msk [vmem:[%s3 + $0xd8] sm:$0xff] %vm412, %v375
  %441 = vst.msk [vmem:[%s3 + $0xe0] sm:$0xff] %vm412, %v376
  %442 = vst.msk [vmem:[%s3 + $0xe8] sm:$0xff] %vm412, %v377
  %443 = vst.msk [vmem:[%s3 + $0xf0] sm:$0xff] %vm412, %v378
  %444 = vst.msk [vmem:[%s3 + $0xf8] sm:$0xff] %vm412, %v379
  %445 = vst.msk [vmem:[%s3 + $0x100] sm:$0xff] %vm412, %v380
  %446 = vst.msk [vmem:[%s3 + $0x108] sm:$0xff] %vm412, %v381
  %447 = vst.msk [vmem:[%s3 + $0x110] sm:$0xff] %vm412, %v382
  %448 = vst.msk [vmem:[%s3 + $0x118] sm:$0xff] %vm412, %v383
  %449 = vst.msk [vmem:[%s3 + $0x120] sm:$0xff] %vm412, %v384
  %450 = vst.msk [vmem:[%s3 + $0x128] sm:$0xff] %vm412, %v385
  %451 = vst.msk [vmem:[%s3 + $0x130] sm:$0xff] %vm412, %v386
  %452 = vst.msk [vmem:[%s3 + $0x138] sm:$0xff] %vm412, %v387
  %453 = vst.msk [vmem:[%s3 + $0x140] sm:$0xff] %vm412, %v388
  %454 = vst.msk [vmem:[%s3 + $0x148] sm:$0xff] %vm412, %v389
  %455 = vst.msk [vmem:[%s3 + $0x150] sm:$0xff] %vm412, %v390
  %456 = vst.msk [vmem:[%s3 + $0x158] sm:$0xff] %vm412, %v391
  %457 = vst.msk [vmem:[%s3 + $0x160] sm:$0xff] %vm412, %v392
  %458 = vst.msk [vmem:[%s3 + $0x168] sm:$0xff] %vm412, %v393
  %459 = vst.msk [vmem:[%s3 + $0x170] sm:$0xff] %vm412, %v394
  %460 = vst.msk [vmem:[%s3 + $0x178] sm:$0xff] %vm412, %v395
  %461 = vst.msk [vmem:[%s3 + $0x180] sm:$0xff] %vm412, %v396
  %462 = vst.msk [vmem:[%s3 + $0x188] sm:$0xff] %vm412, %v397
  %463 = vst.msk [vmem:[%s3 + $0x190] sm:$0xff] %vm412, %v398
  %464 = vst.msk [vmem:[%s3 + $0x198] sm:$0xff] %vm412, %v399
  %465 = vst.msk [vmem:[%s3 + $0x1a0] sm:$0xff] %vm412, %v400
  %466 = vst.msk [vmem:[%s3 + $0x1a8] sm:$0xff] %vm412, %v401
  %467 = vst.msk [vmem:[%s3 + $0x1b0] sm:$0xff] %vm412, %v402
  %468 = vst.msk [vmem:[%s3 + $0x1b8] sm:$0xff] %vm412, %v403
  %469 = vst.msk [vmem:[%s3 + $0x1c0] sm:$0xff] %vm412, %v404
  %470 = vst.msk [vmem:[%s3 + $0x1c8] sm:$0xff] %vm412, %v405
  %471 = vst.msk [vmem:[%s3 + $0x1d0] sm:$0xff] %vm412, %v406
  %472 = vst.msk [vmem:[%s3 + $0x1d8] sm:$0xff] %vm412, %v407
  %473 = vst.msk [vmem:[%s3 + $0x1e0] sm:$0xff] %vm412, %v408
  %474 = vst.msk [vmem:[%s3 + $0x1e8] sm:$0xff] %vm412, %v409
  %475 = vst.msk [vmem:[%s3 + $0x1f0] sm:$0xff] %vm412, %v410
  %476 = vst.msk [vmem:[%s3 + $0x1f8] sm:$0xff] %vm412, %v411
  // Predicated region
  $region14: #{convolutional_forward.3} parent=0 // pred_check
    _
  $region15: #{convolutional_forward.3} parent=0 // pred_check_branch
    %478 = sbr.rel (0) target = $region17
  $region16: #{convolutional_forward.3} parent=0 // pred_region
    _
  $region17: #{convolutional_forward.3} parent=0 // pred_fallthru
    _
  // Predicated region
  $region18: #{convolutional_forward.3} parent=0 // pred_check
    _
  $region19: #{convolutional_forward.3} parent=0 // pred_check_branch
    %480 = sbr.rel (0) target = $region21
  $region20: #{convolutional_forward.3} parent=0 // pred_region
    _
  $region21: #{convolutional_forward.3} parent=0 // pred_fallthru
    _

// kernel: convolutional_forward.2
$region0: #{convolutional_forward.2}
  #allocation0 [shape = 'u32[]', space=smem, size = 0x4, offset = 0x4, fixed_abs, tag = 'smem constant byte address 0x4 - core index']
  #allocation1 [shape = 'u32[144,128]{1,0:T(1,128)}', space=vmem, size = 0x12000, scoped, tag = 'internal scratch']
  %s0 = inlined_call_operand.vmem [shape: f32[512,40], index: 0, kind: input, shape index: {}]
  %s1 = inlined_call_operand.vmem [shape: f32[40,8], index: 1, kind: input, shape index: {}]
  %s2 = inlined_call_operand.vmem [shape: f32[512,8], index: 2, kind: output, shape index: {0}]
  %s3 = inlined_call_operand.vmem [shape: f32[1,1,8], index: 3, kind: output, shape index: {1}]
  %s4 = inlined_call_operand.vmem [shape: f32[1,1,8], index: 4, kind: output, shape index: {2}]
  %5 = xla_tuple %s2, %s3, %s4
  %s6 = sld [smem:[#allocation0]]
  $region34: #{convolutional_forward.2} parent=0
    _
  %s8 = ssub.s32 1, %s6
  %s9 = scalar_select 0, %s8, %s6
  // Predicated region
  $region2: #{convolutional_forward.2} parent=0 // pred_check
    _
  $region3: #{convolutional_forward.2} parent=0 // pred_check_branch
    %11 = sbr.rel (0) target = $region5
  $region4: #{convolutional_forward.2} parent=0 // pred_region
    _
  $region5: #{convolutional_forward.2} parent=0 // pred_fallthru
    _
  // Predicated region
  $region6: #{convolutional_forward.2} parent=0 // pred_check
    _
  $region7: #{convolutional_forward.2} parent=0 // pred_check_branch
    %13 = sbr.rel (0) target = $region9
  $region8: #{convolutional_forward.2} parent=0 // pred_region
    _
  $region9: #{convolutional_forward.2} parent=0 // pred_fallthru
    _
  %v14 = vld [vmem:[%s0] sm:$0xff]
  %v15 = vld [vmem:[%s0 + $0x8] sm:$0xff]
  %v16 = vld [vmem:[%s0 + $0x10] sm:$0xff]
  %v17 = vld [vmem:[%s0 + $0x18] sm:$0xff]
  %v18 = vld [vmem:[%s0 + $0x20] sm:$0xff]
  %v19 = vld [vmem:[%s0 + $0x28] sm:$0xff]
  %v20 = vld [vmem:[%s0 + $0x30] sm:$0xff]
  %v21 = vld [vmem:[%s0 + $0x38] sm:$0xff]
  %v22 = vld [vmem:[%s0 + $0x40] sm:$0xff]
  %v23 = vld [vmem:[%s0 + $0x48] sm:$0xff]
  %v24 = vld [vmem:[%s0 + $0x50] sm:$0xff]
  %v25 = vld [vmem:[%s0 + $0x58] sm:$0xff]
  %v26 = vld [vmem:[%s0 + $0x60] sm:$0xff]
  %v27 = vld [vmem:[%s0 + $0x68] sm:$0xff]
  %v28 = vld [vmem:[%s0 + $0x70] sm:$0xff]
  %v29 = vld [vmem:[%s0 + $0x78] sm:$0xff]
  %v30 = vld [vmem:[%s0 + $0x80] sm:$0xff]
  %v31 = vld [vmem:[%s0 + $0x88] sm:$0xff]
  %v32 = vld [vmem:[%s0 + $0x90] sm:$0xff]
  %v33 = vld [vmem:[%s0 + $0x98] sm:$0xff]
  %v34 = vld [vmem:[%s0 + $0xa0] sm:$0xff]
  %v35 = vld [vmem:[%s0 + $0xa8] sm:$0xff]
  %v36 = vld [vmem:[%s0 + $0xb0] sm:$0xff]
  %v37 = vld [vmem:[%s0 + $0xb8] sm:$0xff]
  %v38 = vld [vmem:[%s0 + $0xc0] sm:$0xff]
  %v39 = vld [vmem:[%s0 + $0xc8] sm:$0xff]
  %v40 = vld [vmem:[%s0 + $0xd0] sm:$0xff]
  %v41 = vld [vmem:[%s0 + $0xd8] sm:$0xff]
  %v42 = vld [vmem:[%s0 + $0xe0] sm:$0xff]
  %v43 = vld [vmem:[%s0 + $0xe8] sm:$0xff]
  %v44 = vld [vmem:[%s0 + $0xf0] sm:$0xff]
  %v45 = vld [vmem:[%s0 + $0xf8] sm:$0xff]
  %v46 = vld [vmem:[%s0 + $0x100] sm:$0xff]
  %v47 = vld [vmem:[%s0 + $0x108] sm:$0xff]
  %v48 = vld [vmem:[%s0 + $0x110] sm:$0xff]
  %v49 = vld [vmem:[%s0 + $0x118] sm:$0xff]
  %v50 = vld [vmem:[%s0 + $0x120] sm:$0xff]
  %v51 = vld [vmem:[%s0 + $0x128] sm:$0xff]
  %v52 = vld [vmem:[%s0 + $0x130] sm:$0xff]
  %v53 = vld [vmem:[%s0 + $0x138] sm:$0xff]
  %v54 = vld [vmem:[%s0 + $0x140] sm:$0xff]
  %v55 = vld [vmem:[%s0 + $0x148] sm:$0xff]
  %v56 = vld [vmem:[%s0 + $0x150] sm:$0xff]
  %v57 = vld [vmem:[%s0 + $0x158] sm:$0xff]
  %v58 = vld [vmem:[%s0 + $0x160] sm:$0xff]
  %v59 = vld [vmem:[%s0 + $0x168] sm:$0xff]
  %v60 = vld [vmem:[%s0 + $0x170] sm:$0xff]
  %v61 = vld [vmem:[%s0 + $0x178] sm:$0xff]
  %v62 = vld [vmem:[%s0 + $0x180] sm:$0xff]
  %v63 = vld [vmem:[%s0 + $0x188] sm:$0xff]
  %v64 = vld [vmem:[%s0 + $0x190] sm:$0xff]
  %v65 = vld [vmem:[%s0 + $0x198] sm:$0xff]
  %v66 = vld [vmem:[%s0 + $0x1a0] sm:$0xff]
  %v67 = vld [vmem:[%s0 + $0x1a8] sm:$0xff]
  %v68 = vld [vmem:[%s0 + $0x1b0] sm:$0xff]
  %v69 = vld [vmem:[%s0 + $0x1b8] sm:$0xff]
  %v70 = vld [vmem:[%s0 + $0x1c0] sm:$0xff]
  %v71 = vld [vmem:[%s0 + $0x1c8] sm:$0xff]
  %v72 = vld [vmem:[%s0 + $0x1d0] sm:$0xff]
  %v73 = vld [vmem:[%s0 + $0x1d8] sm:$0xff]
  %v74 = vld [vmem:[%s0 + $0x1e0] sm:$0xff]
  %v75 = vld [vmem:[%s0 + $0x1e8] sm:$0xff]
  %v76 = vld [vmem:[%s0 + $0x1f0] sm:$0xff]
  %v77 = vld [vmem:[%s0 + $0x1f8] sm:$0xff]
  %v78 = vld [vmem:[%s1] sm:$0xff]
  %v79 = vld [vmem:[%s1 + $0x8] sm:$0xff]
  %v80 = vld [vmem:[%s1 + $0x10] sm:$0xff]
  %v81 = vld [vmem:[%s1 + $0x18] sm:$0xff]
  %v82 = vld [vmem:[%s1 + $0x20] sm:$0xff]
  %vm83 = vcmask 326656
  %v85 = vsel %vm83, %v14, 0
  %v88 = vsel %vm83, %v15, 0
  %v91 = vsel %vm83, %v16, 0
  %v94 = vsel %vm83, %v17, 0
  %v97 = vsel %vm83, %v18, 0
  %v100 = vsel %vm83, %v19, 0
  %v103 = vsel %vm83, %v20, 0
  %v106 = vsel %vm83, %v21, 0
  %v109 = vsel %vm83, %v22, 0
  %v112 = vsel %vm83, %v23, 0
  %v115 = vsel %vm83, %v24, 0
  %v118 = vsel %vm83, %v25, 0
  %v121 = vsel %vm83, %v26, 0
  %v124 = vsel %vm83, %v27, 0
  %v127 = vsel %vm83, %v28, 0
  %v130 = vsel %vm83, %v29, 0
  %v133 = vsel %vm83, %v30, 0
  %v136 = vsel %vm83, %v31, 0
  %v139 = vsel %vm83, %v32, 0
  %v142 = vsel %vm83, %v33, 0
  %v145 = vsel %vm83, %v34, 0
  %v148 = vsel %vm83, %v35, 0
  %v151 = vsel %vm83, %v36, 0
  %v154 = vsel %vm83, %v37, 0
  %v157 = vsel %vm83, %v38, 0
  %v160 = vsel %vm83, %v39, 0
  %v163 = vsel %vm83, %v40, 0
  %v166 = vsel %vm83, %v41, 0
  %v169 = vsel %vm83, %v42, 0
  %v172 = vsel %vm83, %v43, 0
  %v175 = vsel %vm83, %v44, 0
  %v178 = vsel %vm83, %v45, 0
  %v181 = vsel %vm83, %v46, 0
  %v184 = vsel %vm83, %v47, 0
  %v187 = vsel %vm83, %v48, 0
  %v190 = vsel %vm83, %v49, 0
  %v193 = vsel %vm83, %v50, 0
  %v196 = vsel %vm83, %v51, 0
  %v199 = vsel %vm83, %v52, 0
  %v202 = vsel %vm83, %v53, 0
  %v205 = vsel %vm83, %v54, 0
  %v208 = vsel %vm83, %v55, 0
  %v211 = vsel %vm83, %v56, 0
  %v214 = vsel %vm83, %v57, 0
  %v217 = vsel %vm83, %v58, 0
  %v220 = vsel %vm83, %v59, 0
  %v223 = vsel %vm83, %v60, 0
  %v226 = vsel %vm83, %v61, 0
  %v229 = vsel %vm83, %v62, 0
  %v232 = vsel %vm83, %v63, 0
  %v235 = vsel %vm83, %v64, 0
  %v238 = vsel %vm83, %v65, 0
  %v241 = vsel %vm83, %v66, 0
  %v244 = vsel %vm83, %v67, 0
  %v247 = vsel %vm83, %v68, 0
  %v250 = vsel %vm83, %v69, 0
  %v253 = vsel %vm83, %v70, 0
  %v256 = vsel %vm83, %v71, 0
  %v259 = vsel %vm83, %v72, 0
  %v262 = vsel %vm83, %v73, 0
  %v265 = vsel %vm83, %v74, 0
  %v268 = vsel %vm83, %v75, 0
  %v271 = vsel %vm83, %v76, 0
  %v274 = vsel %vm83, %v77, 0
  %276 = vmatprep.subr.mxu0 0.0
  %277 = vmatpush1.msra.mxu0 %v78
  %278 = vmatprep.subr.mxu0 0.0
  %279 = vmatpush1.msra.mxu0 %v79
  %280 = vmatprep.subr.mxu0 0.0
  %281 = vmatpush1.msra.mxu0 %v80
  %282 = vmatprep.subr.mxu0 0.0
  %283 = vmatpush1.msra.mxu0 %v81
  %284 = vmatprep.subr.mxu0 0.0
  %285 = vmatpush1.msra.mxu0 %v82
  %286 = vmatprep.subr.mxu0 0.0
  %287 = vmatpush1.msra.mxu0 0.0
  %288 = vmatprep.subr.mxu0 0.0
  %289 = vmatpush1.msra.mxu0 0.0
  %290 = vmatprep.subr.mxu0 0.0
  %291 = vmatpush1.msra.mxu0 0.0
  %292 = vmatprep.subr.mxu0 0.0
  %293 = vmatpush1.msra.mxu0 0.0
  %294 = vmatprep.subr.mxu0 0.0
  %295 = vmatpush1.msra.mxu0 0.0
  %296 = vmatprep.subr.mxu0 0.0
  %297 = vmatpush1.msra.mxu0 0.0
  %298 = vmatprep.subr.mxu0 0.0
  %299 = vmatpush1.msra.mxu0 0.0
  %300 = vmatprep.subr.mxu0 0.0
  %301 = vmatpush1.msra.mxu0 0.0
  %302 = vmatprep.subr.mxu0 0.0
  %303 = vmatpush1.msra.mxu0 0.0
  %304 = vmatprep.subr.mxu0 0.0
  %305 = vmatpush1.msra.mxu0 0.0
  %306 = vmatprep.subr.mxu0 0.0
  %307 = vmatpush1.msra.mxu0 0.0
  %308 = vmatprep.subr.mxu0 0.0
  %309 = vmatpush1.msra.mxu0 0.0
  %310 = vmatprep.subr.mxu0 0.0
  %311 = vmatpush1.msra.mxu0 0.0
  %312 = vmatprep.subr.mxu0 0.0
  %313 = vmatpush1.msra.mxu0 0.0
  %314 = vmatprep.subr.mxu0 0.0
  %315 = vmatpush1.msra.mxu0 0.0
  %316 = vmatprep.subr.mxu0 0.0
  %317 = vmatpush1.msra.mxu0 0.0
  %318 = vmatprep.subr.mxu0 0.0
  %319 = vmatpush1.msra.mxu0 0.0
  %320 = vmatprep.subr.mxu0 0.0
  %321 = vmatpush1.msra.mxu0 0.0
  %322 = vmatprep.subr.mxu0 0.0
  %323 = vmatpush1.msra.mxu0 0.0
  %324 = vmatprep.subr.mxu0 0.0
  %325 = vmatpush1.msra.mxu0 0.0
  %326 = vmatprep.subr.mxu0 0.0
  %327 = vmatpush1.msra.mxu0 0.0
  %328 = vmatprep.subr.mxu0 0.0
  %329 = vmatpush1.msra.mxu0 0.0
  %330 = vmatprep.subr.mxu0 0.0
  %331 = vmatpush1.msra.mxu0 0.0
  %332 = vmatprep.subr.mxu0 0.0
  %333 = vmatpush1.msra.mxu0 0.0
  %334 = vmatprep.subr.mxu0 0.0
  %335 = vmatpush1.msra.mxu0 0.0
  %336 = vmatprep.subr.mxu0 0.0
  %337 = vmatpush1.msra.mxu0 0.0
  %338 = vmatprep.subr.mxu0 0.0
  %339 = vmatpush1.msra.mxu0 0.0
  %340 = vmatprep.mubr.f32.mxu0 0.0
  %341 = vmatmul.mubr.f32.gmra.mrb[0].mxu0 %v85
  %v342 = vpop.f32.mrb[0].mxu0
  %v343 = vadd.f32 0.0, %v342
  %v344 = vpop.f32.mrb[0].mxu0
  %345 = vmatprep.mubr.f32.mxu0 0.0
  %346 = vmatmul.mubr.f32.gmra.mrb[0].mxu0 %v88
  %v347 = vpop.f32.mrb[0].mxu0
  %v348 = vadd.f32 0.0, %v347
  %v349 = vpop.f32.mrb[0].mxu0
  %350 = vmatprep.mubr.f32.mxu0 0.0
  %351 = vmatmul.mubr.f32.gmra.mrb[0].mxu0 %v91
  %v352 = vpop.f32.mrb[0].mxu0
  %v353 = vadd.f32 0.0, %v352
  %v354 = vpop.f32.mrb[0].mxu0
  %355 = vmatprep.mubr.f32.mxu0 0.0
  %356 = vmatmul.mubr.f32.gmra.mrb[0].mxu0 %v94
  %v357 = vpop.f32.mrb[0].mxu0
  %v358 = vadd.f32 0.0, %v357
  %v359 = vpop.f32.mrb[0].mxu0
  %360 = vmatprep.mubr.f32.mxu0 0.0
  %361 = vmatmul.mubr.f32.gmra.mrb[0].mxu0 %v97
  %v362 = vpop.f32.mrb[0].mxu0
  %v363 = vadd.f32 0.0, %v362
  %v364 = vpop.f32.mrb[0].mxu0
  %365 = vmatprep.mubr.f32.mxu0 0.0
  %366 = vmatmul.mubr.f32.gmra.mrb[0].mxu0 %v100
  %v367 = vpop.f32.mrb[0].mxu0
  %v368 = vadd.f32 0.0, %v367
  %v369 = vpop.f32.mrb[0].mxu0
  %370 = vmatprep.mubr.f32.mxu0 0.0
  %371 = vmatmul.mubr.f32.gmra.mrb[0].mxu0 %v103
  %v372 = vpop.f32.mrb[0].mxu0
  %v373 = vadd.f32 0.0, %v372
  %v374 = vpop.f32.mrb[0].mxu0
  %375 = vmatprep.mubr.f32.mxu0 0.0
  %376 = vmatmul.mubr.f32.gmra.mrb[0].mxu0 %v106
  %v377 = vpop.f32.mrb[0].mxu0
  %v378 = vadd.f32 0.0, %v377
  %v379 = vpop.f32.mrb[0].mxu0
  %380 = vmatprep.mubr.f32.mxu0 0.0
  %381 = vmatmul.mubr.f32.gmra.mrb[0].mxu0 %v109
  %v382 = vpop.f32.mrb[0].mxu0
  %v383 = vadd.f32 0.0, %v382
  %v384 = vpop.f32.mrb[0].mxu0
  %385 = vmatprep.mubr.f32.mxu0 0.0
  %386 = vmatmul.mubr.f32.gmra.mrb[0].mxu0 %v112
  %v387 = vpop.f32.mrb[0].mxu0
  %v388 = vadd.f32 0.0, %v387
  %v389 = vpop.f32.mrb[0].mxu0
  %390 = vmatprep.mubr.f32.mxu0 0.0
  %391 = vmatmul.mubr.f32.gmra.mrb[0].mxu0 %v115
  %v392 = vpop.f32.mrb[0].mxu0
  %v393 = vadd.f32 0.0, %v392
  %v394 = vpop.f32.mrb[0].mxu0
  %395 = vmatprep.mubr.f32.mxu0 0.0
  %396 = vmatmul.mubr.f32.gmra.mrb[0].mxu0 %v118
  %v397 = vpop.f32.mrb[0].mxu0
  %v398 = vadd.f32 0.0, %v397
  %v399 = vpop.f32.mrb[0].mxu0
  %400 = vmatprep.mubr.f32.mxu0 0.0
  %401 = vmatmul.mubr.f32.gmra.mrb[0].mxu0 %v121
  %v402 = vpop.f32.mrb[0].mxu0
  %v403 = vadd.f32 0.0, %v402
  %v404 = vpop.f32.mrb[0].mxu0
  %405 = vmatprep.mubr.f32.mxu0 0.0
  %406 = vmatmul.mubr.f32.gmra.mrb[0].mxu0 %v124
  %v407 = vpop.f32.mrb[0].mxu0
  %v408 = vadd.f32 0.0, %v407
  %v409 = vpop.f32.mrb[0].mxu0
  %410 = vmatprep.mubr.f32.mxu0 0.0
  %411 = vmatmul.mubr.f32.gmra.mrb[0].mxu0 %v127
  %v412 = vpop.f32.mrb[0].mxu0
  %v413 = vadd.f32 0.0, %v412
  %v414 = vpop.f32.mrb[0].mxu0
  %415 = vmatprep.mubr.f32.mxu0 0.0
  %416 = vmatmul.mubr.f32.gmra.mrb[0].mxu0 %v130
  %v417 = vpop.f32.mrb[0].mxu0
  %v418 = vadd.f32 0.0, %v417
  %v419 = vpop.f32.mrb[0].mxu0
  %420 = vmatprep.mubr.f32.mxu0 0.0
  %421 = vmatmul.mubr.f32.gmra.mrb[0].mxu0 %v133
  %v422 = vpop.f32.mrb[0].mxu0
  %v423 = vadd.f32 0.0, %v422
  %v424 = vpop.f32.mrb[0].mxu0
  %425 = vmatprep.mubr.f32.mxu0 0.0
  %426 = vmatmul.mubr.f32.gmra.mrb[0].mxu0 %v136
  %v427 = vpop.f32.mrb[0].mxu0
  %v428 = vadd.f32 0.0, %v427
  %v429 = vpop.f32.mrb[0].mxu0
  %430 = vmatprep.mubr.f32.mxu0 0.0
  %431 = vmatmul.mubr.f32.gmra.mrb[0].mxu0 %v139
  %v432 = vpop.f32.mrb[0].mxu0
  %v433 = vadd.f32 0.0, %v432
  %v434 = vpop.f32.mrb[0].mxu0
  %435 = vmatprep.mubr.f32.mxu0 0.0
  %436 = vmatmul.mubr.f32.gmra.mrb[0].mxu0 %v142
  %v437 = vpop.f32.mrb[0].mxu0
  %v438 = vadd.f32 0.0, %v437
  %v439 = vpop.f32.mrb[0].mxu0
  %440 = vmatprep.mubr.f32.mxu0 0.0
  %441 = vmatmul.mubr.f32.gmra.mrb[0].mxu0 %v145
  %v442 = vpop.f32.mrb[0].mxu0
  %v443 = vadd.f32 0.0, %v442
  %v444 = vpop.f32.mrb[0].mxu0
  %445 = vmatprep.mubr.f32.mxu0 0.0
  %446 = vmatmul.mubr.f32.gmra.mrb[0].mxu0 %v148
  %v447 = vpop.f32.mrb[0].mxu0
  %v448 = vadd.f32 0.0, %v447
  %v449 = vpop.f32.mrb[0].mxu0
  %450 = vmatprep.mubr.f32.mxu0 0.0
  %451 = vmatmul.mubr.f32.gmra.mrb[0].mxu0 %v151
  %v452 = vpop.f32.mrb[0].mxu0
  %v453 = vadd.f32 0.0, %v452
  %v454 = vpop.f32.mrb[0].mxu0
  %455 = vmatprep.mubr.f32.mxu0 0.0
  %456 = vmatmul.mubr.f32.gmra.mrb[0].mxu0 %v154
  %v457 = vpop.f32.mrb[0].mxu0
  %v458 = vadd.f32 0.0, %v457
  %v459 = vpop.f32.mrb[0].mxu0
  %460 = vmatprep.mubr.f32.mxu0 0.0
  %461 = vmatmul.mubr.f32.gmra.mrb[0].mxu0 %v157
  %v462 = vpop.f32.mrb[0].mxu0
  %v463 = vadd.f32 0.0, %v462
  %v464 = vpop.f32.mrb[0].mxu0
  %465 = vmatprep.mubr.f32.mxu0 0.0
  %466 = vmatmul.mubr.f32.gmra.mrb[0].mxu0 %v160
  %v467 = vpop.f32.mrb[0].mxu0
  %v468 = vadd.f32 0.0, %v467
  %v469 = vpop.f32.mrb[0].mxu0
  %470 = vmatprep.mubr.f32.mxu0 0.0
  %471 = vmatmul.mubr.f32.gmra.mrb[0].mxu0 %v163
  %v472 = vpop.f32.mrb[0].mxu0
  %v473 = vadd.f32 0.0, %v472
  %v474 = vpop.f32.mrb[0].mxu0
  %475 = vmatprep.mubr.f32.mxu0 0.0
  %476 = vmatmul.mubr.f32.gmra.mrb[0].mxu0 %v166
  %v477 = vpop.f32.mrb[0].mxu0
  %v478 = vadd.f32 0.0, %v477
  %v479 = vpop.f32.mrb[0].mxu0
  %480 = vmatprep.mubr.f32.mxu0 0.0
  %481 = vmatmul.mubr.f32.gmra.mrb[0].mxu0 %v169
  %v482 = vpop.f32.mrb[0].mxu0
  %v483 = vadd.f32 0.0, %v482
  %v484 = vpop.f32.mrb[0].mxu0
  %485 = vmatprep.mubr.f32.mxu0 0.0
  %486 = vmatmul.mubr.f32.gmra.mrb[0].mxu0 %v172
  %v487 = vpop.f32.mrb[0].mxu0
  %v488 = vadd.f32 0.0, %v487
  %v489 = vpop.f32.mrb[0].mxu0
  %490 = vmatprep.mubr.f32.mxu0 0.0
  %491 = vmatmul.mubr.f32.gmra.mrb[0].mxu0 %v175
  %v492 = vpop.f32.mrb[0].mxu0
  %v493 = vadd.f32 0.0, %v492
  %v494 = vpop.f32.mrb[0].mxu0
  %495 = vmatprep.mubr.f32.mxu0 0.0
  %496 = vmatmul.mubr.f32.gmra.mrb[0].mxu0 %v178
  %v497 = vpop.f32.mrb[0].mxu0
  %v498 = vadd.f32 0.0, %v497
  %v499 = vpop.f32.mrb[0].mxu0
  %500 = vmatprep.mubr.f32.mxu0 0.0
  %501 = vmatmul.mubr.f32.gmra.mrb[0].mxu0 %v181
  %v502 = vpop.f32.mrb[0].mxu0
  %v503 = vadd.f32 0.0, %v502
  %v504 = vpop.f32.mrb[0].mxu0
  %505 = vmatprep.mubr.f32.mxu0 0.0
  %506 = vmatmul.mubr.f32.gmra.mrb[0].mxu0 %v184
  %v507 = vpop.f32.mrb[0].mxu0
  %v508 = vadd.f32 0.0, %v507
  %v509 = vpop.f32.mrb[0].mxu0
  %510 = vmatprep.mubr.f32.mxu0 0.0
  %511 = vmatmul.mubr.f32.gmra.mrb[0].mxu0 %v187
  %v512 = vpop.f32.mrb[0].mxu0
  %v513 = vadd.f32 0.0, %v512
  %v514 = vpop.f32.mrb[0].mxu0
  %515 = vmatprep.mubr.f32.mxu0 0.0
  %516 = vmatmul.mubr.f32.gmra.mrb[0].mxu0 %v190
  %v517 = vpop.f32.mrb[0].mxu0
  %v518 = vadd.f32 0.0, %v517
  %v519 = vpop.f32.mrb[0].mxu0
  %520 = vmatprep.mubr.f32.mxu0 0.0
  %521 = vmatmul.mubr.f32.gmra.mrb[0].mxu0 %v193
  %v522 = vpop.f32.mrb[0].mxu0
  %v523 = vadd.f32 0.0, %v522
  %v524 = vpop.f32.mrb[0].mxu0
  %525 = vmatprep.mubr.f32.mxu0 0.0
  %526 = vmatmul.mubr.f32.gmra.mrb[0].mxu0 %v196
  %v527 = vpop.f32.mrb[0].mxu0
  %v528 = vadd.f32 0.0, %v527
  %v529 = vpop.f32.mrb[0].mxu0
  %530 = vmatprep.mubr.f32.mxu0 0.0
  %531 = vmatmul.mubr.f32.gmra.mrb[0].mxu0 %v199
  %v532 = vpop.f32.mrb[0].mxu0
  %v533 = vadd.f32 0.0, %v532
  %v534 = vpop.f32.mrb[0].mxu0
  %535 = vmatprep.mubr.f32.mxu0 0.0
  %536 = vmatmul.mubr.f32.gmra.mrb[0].mxu0 %v202
  %v537 = vpop.f32.mrb[0].mxu0
  %v538 = vadd.f32 0.0, %v537
  %v539 = vpop.f32.mrb[0].mxu0
  %540 = vmatprep.mubr.f32.mxu0 0.0
  %541 = vmatmul.mubr.f32.gmra.mrb[0].mxu0 %v205
  %v542 = vpop.f32.mrb[0].mxu0
  %v543 = vadd.f32 0.0, %v542
  %v544 = vpop.f32.mrb[0].mxu0
  %545 = vmatprep.mubr.f32.mxu0 0.0
  %546 = vmatmul.mubr.f32.gmra.mrb[0].mxu0 %v208
  %v547 = vpop.f32.mrb[0].mxu0
  %v548 = vadd.f32 0.0, %v547
  %v549 = vpop.f32.mrb[0].mxu0
  %550 = vmatprep.mubr.f32.mxu0 0.0
  %551 = vmatmul.mubr.f32.gmra.mrb[0].mxu0 %v211
  %v552 = vpop.f32.mrb[0].mxu0
  %v553 = vadd.f32 0.0, %v552
  %v554 = vpop.f32.mrb[0].mxu0
  %555 = vmatprep.mubr.f32.mxu0 0.0
  %556 = vmatmul.mubr.f32.gmra.mrb[0].mxu0 %v214
  %v557 = vpop.f32.mrb[0].mxu0
  %v558 = vadd.f32 0.0, %v557
  %v559 = vpop.f32.mrb[0].mxu0
  %560 = vmatprep.mubr.f32.mxu0 0.0
  %561 = vmatmul.mubr.f32.gmra.mrb[0].mxu0 %v217
  %v562 = vpop.f32.mrb[0].mxu0
  %v563 = vadd.f32 0.0, %v562
  %v564 = vpop.f32.mrb[0].mxu0
  %565 = vmatprep.mubr.f32.mxu0 0.0
  %566 = vmatmul.mubr.f32.gmra.mrb[0].mxu0 %v220
  %v567 = vpop.f32.mrb[0].mxu0
  %v568 = vadd.f32 0.0, %v567
  %v569 = vpop.f32.mrb[0].mxu0
  %570 = vmatprep.mubr.f32.mxu0 0.0
  %571 = vmatmul.mubr.f32.gmra.mrb[0].mxu0 %v223
  %v572 = vpop.f32.mrb[0].mxu0
  %v573 = vadd.f32 0.0, %v572
  %v574 = vpop.f32.mrb[0].mxu0
  %575 = vmatprep.mubr.f32.mxu0 0.0
  %576 = vmatmul.mubr.f32.gmra.mrb[0].mxu0 %v226
  %v577 = vpop.f32.mrb[0].mxu0
  %v578 = vadd.f32 0.0, %v577
  %v579 = vpop.f32.mrb[0].mxu0
  %580 = vmatprep.mubr.f32.mxu0 0.0
  %581 = vmatmul.mubr.f32.gmra.mrb[0].mxu0 %v229
  %v582 = vpop.f32.mrb[0].mxu0
  %v583 = vadd.f32 0.0, %v582
  %v584 = vpop.f32.mrb[0].mxu0
  %585 = vmatprep.mubr.f32.mxu0 0.0
  %586 = vmatmul.mubr.f32.gmra.mrb[0].mxu0 %v232
  %v587 = vpop.f32.mrb[0].mxu0
  %v588 = vadd.f32 0.0, %v587
  %v589 = vpop.f32.mrb[0].mxu0
  %590 = vmatprep.mubr.f32.mxu0 0.0
  %591 = vmatmul.mubr.f32.gmra.mrb[0].mxu0 %v235
  %v592 = vpop.f32.mrb[0].mxu0
  %v593 = vadd.f32 0.0, %v592
  %v594 = vpop.f32.mrb[0].mxu0
  %595 = vmatprep.mubr.f32.mxu0 0.0
  %596 = vmatmul.mubr.f32.gmra.mrb[0].mxu0 %v238
  %v597 = vpop.f32.mrb[0].mxu0
  %v598 = vadd.f32 0.0, %v597
  %v599 = vpop.f32.mrb[0].mxu0
  %600 = vmatprep.mubr.f32.mxu0 0.0
  %601 = vmatmul.mubr.f32.gmra.mrb[0].mxu0 %v241
  %v602 = vpop.f32.mrb[0].mxu0
  %v603 = vadd.f32 0.0, %v602
  %v604 = vpop.f32.mrb[0].mxu0
  %605 = vmatprep.mubr.f32.mxu0 0.0
  %606 = vmatmul.mubr.f32.gmra.mrb[0].mxu0 %v244
  %v607 = vpop.f32.mrb[0].mxu0
  %v608 = vadd.f32 0.0, %v607
  %v609 = vpop.f32.mrb[0].mxu0
  %610 = vmatprep.mubr.f32.mxu0 0.0
  %611 = vmatmul.mubr.f32.gmra.mrb[0].mxu0 %v247
  %v612 = vpop.f32.mrb[0].mxu0
  %v613 = vadd.f32 0.0, %v612
  %v614 = vpop.f32.mrb[0].mxu0
  %615 = vmatprep.mubr.f32.mxu0 0.0
  %616 = vmatmul.mubr.f32.gmra.mrb[0].mxu0 %v250
  %v617 = vpop.f32.mrb[0].mxu0
  %v618 = vadd.f32 0.0, %v617
  %v619 = vpop.f32.mrb[0].mxu0
  %620 = vmatprep.mubr.f32.mxu0 0.0
  %621 = vmatmul.mubr.f32.gmra.mrb[0].mxu0 %v253
  %v622 = vpop.f32.mrb[0].mxu0
  %v623 = vadd.f32 0.0, %v622
  %v624 = vpop.f32.mrb[0].mxu0
  %625 = vmatprep.mubr.f32.mxu0 0.0
  %626 = vmatmul.mubr.f32.gmra.mrb[0].mxu0 %v256
  %v627 = vpop.f32.mrb[0].mxu0
  %v628 = vadd.f32 0.0, %v627
  %v629 = vpop.f32.mrb[0].mxu0
  %630 = vmatprep.mubr.f32.mxu0 0.0
  %631 = vmatmul.mubr.f32.gmra.mrb[0].mxu0 %v259
  %v632 = vpop.f32.mrb[0].mxu0
  %v633 = vadd.f32 0.0, %v632
  %v634 = vpop.f32.mrb[0].mxu0
  %635 = vmatprep.mubr.f32.mxu0 0.0
  %636 = vmatmul.mubr.f32.gmra.mrb[0].mxu0 %v262
  %v637 = vpop.f32.mrb[0].mxu0
  %v638 = vadd.f32 0.0, %v637
  %v639 = vpop.f32.mrb[0].mxu0
  %640 = vmatprep.mubr.f32.mxu0 0.0
  %641 = vmatmul.mubr.f32.gmra.mrb[0].mxu0 %v265
  %v642 = vpop.f32.mrb[0].mxu0
  %v643 = vadd.f32 0.0, %v642
  %v644 = vpop.f32.mrb[0].mxu0
  %645 = vmatprep.mubr.f32.mxu0 0.0
  %646 = vmatmul.mubr.f32.gmra.mrb[0].mxu0 %v268
  %v647 = vpop.f32.mrb[0].mxu0
  %v648 = vadd.f32 0.0, %v647
  %v649 = vpop.f32.mrb[0].mxu0
  %650 = vmatprep.mubr.f32.mxu0 0.0
  %651 = vmatmul.mubr.f32.gmra.mrb[0].mxu0 %v271
  %v652 = vpop.f32.mrb[0].mxu0
  %v653 = vadd.f32 0.0, %v652
  %v654 = vpop.f32.mrb[0].mxu0
  %655 = vmatprep.mubr.f32.mxu0 0.0
  %656 = vmatmul.mubr.f32.gmra.mrb[0].mxu0 %v274
  %v657 = vpop.f32.mrb[0].mxu0
  %v658 = vadd.f32 0.0, %v657
  %v659 = vpop.f32.mrb[0].mxu0
  %660 = vdwg.mxu0
  %vm661 = vcmask 64512
  %662 = vst.msk [vmem:[%s2] sm:$0xff] %vm661, %v343
  %663 = vst.msk [vmem:[%s2 + $0x8] sm:$0xff] %vm661, %v348
  %664 = vst.msk [vmem:[%s2 + $0x10] sm:$0xff] %vm661, %v353
  %665 = vst.msk [vmem:[%s2 + $0x18] sm:$0xff] %vm661, %v358
  %666 = vst.msk [vmem:[%s2 + $0x20] sm:$0xff] %vm661, %v363
  %667 = vst.msk [vmem:[%s2 + $0x28] sm:$0xff] %vm661, %v368
  %668 = vst.msk [vmem:[%s2 + $0x30] sm:$0xff] %vm661, %v373
  %669 = vst.msk [vmem:[%s2 + $0x38] sm:$0xff] %vm661, %v378
  %670 = vst.msk [vmem:[%s2 + $0x40] sm:$0xff] %vm661, %v383
  %671 = vst.msk [vmem:[%s2 + $0x48] sm:$0xff] %vm661, %v388
  %672 = vst.msk [vmem:[%s2 + $0x50] sm:$0xff] %vm661, %v393
  %673 = vst.msk [vmem:[%s2 + $0x58] sm:$0xff] %vm661, %v398
  %674 = vst.msk [vmem:[%s2 + $0x60] sm:$0xff] %vm661, %v403
  %675 = vst.msk [vmem:[%s2 + $0x68] sm:$0xff] %vm661, %v408
  %676 = vst.msk [vmem:[%s2 + $0x70] sm:$0xff] %vm661, %v413
  %677 = vst.msk [vmem:[%s2 + $0x78] sm:$0xff] %vm661, %v418
  %678 = vst.msk [vmem:[%s2 + $0x80] sm:$0xff] %vm661, %v423
  %679 = vst.msk [vmem:[%s2 + $0x88] sm:$0xff] %vm661, %v428
  %680 = vst.msk [vmem:[%s2 + $0x90] sm:$0xff] %vm661, %v433
  %681 = vst.msk [vmem:[%s2 + $0x98] sm:$0xff] %vm661, %v438
  %682 = vst.msk [vmem:[%s2 + $0xa0] sm:$0xff] %vm661, %v443
  %683 = vst.msk [vmem:[%s2 + $0xa8] sm:$0xff] %vm661, %v448
  %684 = vst.msk [vmem:[%s2 + $0xb0] sm:$0xff] %vm661, %v453
  %685 = vst.msk [vmem:[%s2 + $0xb8] sm:$0xff] %vm661, %v458
  %686 = vst.msk [vmem:[%s2 + $0xc0] sm:$0xff] %vm661, %v463
  %687 = vst.msk [vmem:[%s2 + $0xc8] sm:$0xff] %vm661, %v468
  %688 = vst.msk [vmem:[%s2 + $0xd0] sm:$0xff] %vm661, %v473
  %689 = vst.msk [vmem:[%s2 + $0xd8] sm:$0xff] %vm661, %v478
  %690 = vst.msk [vmem:[%s2 + $0xe0] sm:$0xff] %vm661, %v483
  %691 = vst.msk [vmem:[%s2 + $0xe8] sm:$0xff] %vm661, %v488
  %692 = vst.msk [vmem:[%s2 + $0xf0] sm:$0xff] %vm661, %v493
  %693 = vst.msk [vmem:[%s2 + $0xf8] sm:$0xff] %vm661, %v498
  %694 = vst.msk [vmem:[%s2 + $0x100] sm:$0xff] %vm661, %v503
  %695 = vst.msk [vmem:[%s2 + $0x108] sm:$0xff] %vm661, %v508
  %696 = vst.msk [vmem:[%s2 + $0x110] sm:$0xff] %vm661, %v513
  %697 = vst.msk [vmem:[%s2 + $0x118] sm:$0xff] %vm661, %v518
  %698 = vst.msk [vmem:[%s2 + $0x120] sm:$0xff] %vm661, %v523
  %699 = vst.msk [vmem:[%s2 + $0x128] sm:$0xff] %vm661, %v528
  %700 = vst.msk [vmem:[%s2 + $0x130] sm:$0xff] %vm661, %v533
  %701 = vst.msk [vmem:[%s2 + $0x138] sm:$0xff] %vm661, %v538
  %702 = vst.msk [vmem:[%s2 + $0x140] sm:$0xff] %vm661, %v543
  %703 = vst.msk [vmem:[%s2 + $0x148] sm:$0xff] %vm661, %v548
  %704 = vst.msk [vmem:[%s2 + $0x150] sm:$0xff] %vm661, %v553
  %705 = vst.msk [vmem:[%s2 + $0x158] sm:$0xff] %vm661, %v558
  %706 = vst.msk [vmem:[%s2 + $0x160] sm:$0xff] %vm661, %v563
  %707 = vst.msk [vmem:[%s2 + $0x168] sm:$0xff] %vm661, %v568
  %708 = vst.msk [vmem:[%s2 + $0x170] sm:$0xff] %vm661, %v573
  %709 = vst.msk [vmem:[%s2 + $0x178] sm:$0xff] %vm661, %v578
  %710 = vst.msk [vmem:[%s2 + $0x180] sm:$0xff] %vm661, %v583
  %711 = vst.msk [vmem:[%s2 + $0x188] sm:$0xff] %vm661, %v588
  %712 = vst.msk [vmem:[%s2 + $0x190] sm:$0xff] %vm661, %v593
  %713 = vst.msk [vmem:[%s2 + $0x198] sm:$0xff] %vm661, %v598
  %714 = vst.msk [vmem:[%s2 + $0x1a0] sm:$0xff] %vm661, %v603
  %715 = vst.msk [vmem:[%s2 + $0x1a8] sm:$0xff] %vm661, %v608
  %716 = vst.msk [vmem:[%s2 + $0x1b0] sm:$0xff] %vm661, %v613
  %717 = vst.msk [vmem:[%s2 + $0x1b8] sm:$0xff] %vm661, %v618
  %718 = vst.msk [vmem:[%s2 + $0x1c0] sm:$0xff] %vm661, %v623
  %719 = vst.msk [vmem:[%s2 + $0x1c8] sm:$0xff] %vm661, %v628
  %720 = vst.msk [vmem:[%s2 + $0x1d0] sm:$0xff] %vm661, %v633
  %721 = vst.msk [vmem:[%s2 + $0x1d8] sm:$0xff] %vm661, %v638
  %722 = vst.msk [vmem:[%s2 + $0x1e0] sm:$0xff] %vm661, %v643
  %723 = vst.msk [vmem:[%s2 + $0x1e8] sm:$0xff] %vm661, %v648
  %724 = vst.msk [vmem:[%s2 + $0x1f0] sm:$0xff] %vm661, %v653
  %725 = vst.msk [vmem:[%s2 + $0x1f8] sm:$0xff] %vm661, %v658
  %v726 = vsel %vm661, %v343, 0.0
  %v727 = vsel %vm661, %v348, 0.0
  %v728 = vadd.f32 %v726, %v727
  %v729 = vsel %vm661, %v353, 0.0
  %v730 = vadd.f32 %v728, %v729
  %v731 = vsel %vm661, %v358, 0.0
  %v732 = vadd.f32 %v730, %v731
  %v733 = vsel %vm661, %v363, 0.0
  %v734 = vadd.f32 %v732, %v733
  %v735 = vsel %vm661, %v368, 0.0
  %v736 = vadd.f32 %v734, %v735
  %v737 = vsel %vm661, %v373, 0.0
  %v738 = vadd.f32 %v736, %v737
  %v739 = vsel %vm661, %v378, 0.0
  %v740 = vadd.f32 %v738, %v739
  %v741 = vsel %vm661, %v383, 0.0
  %v742 = vadd.f32 %v740, %v741
  %v743 = vsel %vm661, %v388, 0.0
  %v744 = vadd.f32 %v742, %v743
  %v745 = vsel %vm661, %v393, 0.0
  %v746 = vadd.f32 %v744, %v745
  %v747 = vsel %vm661, %v398, 0.0
  %v748 = vadd.f32 %v746, %v747
  %v749 = vsel %vm661, %v403, 0.0
  %v750 = vadd.f32 %v748, %v749
  %v751 = vsel %vm661, %v408, 0.0
  %v752 = vadd.f32 %v750, %v751
  %v753 = vsel %vm661, %v413, 0.0
  %v754 = vadd.f32 %v752, %v753
  %v755 = vsel %vm661, %v418, 0.0
  %v756 = vadd.f32 %v754, %v755
  %v757 = vsel %vm661, %v423, 0.0
  %v758 = vadd.f32 %v756, %v757
  %v759 = vsel %vm661, %v428, 0.0
  %v760 = vadd.f32 %v758, %v759
  %v761 = vsel %vm661, %v433, 0.0
  %v762 = vadd.f32 %v760, %v761
  %v763 = vsel %vm661, %v438, 0.0
  %v764 = vadd.f32 %v762, %v763
  %v765 = vsel %vm661, %v443, 0.0
  %v766 = vadd.f32 %v764, %v765
  %v767 = vsel %vm661, %v448, 0.0
  %v768 = vadd.f32 %v766, %v767
  %v769 = vsel %vm661, %v453, 0.0
  %v770 = vadd.f32 %v768, %v769
  %v771 = vsel %vm661, %v458, 0.0
  %v772 = vadd.f32 %v770, %v771
  %v773 = vsel %vm661, %v463, 0.0
  %v774 = vadd.f32 %v772, %v773
  %v775 = vsel %vm661, %v468, 0.0
  %v776 = vadd.f32 %v774, %v775
  %v777 = vsel %vm661, %v473, 0.0
  %v778 = vadd.f32 %v776, %v777
  %v779 = vsel %vm661, %v478, 0.0
  %v780 = vadd.f32 %v778, %v779
  %v781 = vsel %vm661, %v483, 0.0
  %v782 = vadd.f32 %v780, %v781
  %v783 = vsel %vm661, %v488, 0.0
  %v784 = vadd.f32 %v782, %v783
  %v785 = vsel %vm661, %v493, 0.0
  %v786 = vadd.f32 %v784, %v785
  %v787 = vsel %vm661, %v498, 0.0
  %v788 = vadd.f32 %v786, %v787
  %v789 = vsel %vm661, %v503, 0.0
  %v790 = vadd.f32 %v788, %v789
  %v791 = vsel %vm661, %v508, 0.0
  %v792 = vadd.f32 %v790, %v791
  %v793 = vsel %vm661, %v513, 0.0
  %v794 = vadd.f32 %v792, %v793
  %v795 = vsel %vm661, %v518, 0.0
  %v796 = vadd.f32 %v794, %v795
  %v797 = vsel %vm661, %v523, 0.0
  %v798 = vadd.f32 %v796, %v797
  %v799 = vsel %vm661, %v528, 0.0
  %v800 = vadd.f32 %v798, %v799
  %v801 = vsel %vm661, %v533, 0.0
  %v802 = vadd.f32 %v800, %v801
  %v803 = vsel %vm661, %v538, 0.0
  %v804 = vadd.f32 %v802, %v803
  %v805 = vsel %vm661, %v543, 0.0
  %v806 = vadd.f32 %v804, %v805
  %v807 = vsel %vm661, %v548, 0.0
  %v808 = vadd.f32 %v806, %v807
  %v809 = vsel %vm661, %v553, 0.0
  %v810 = vadd.f32 %v808, %v809
  %v811 = vsel %vm661, %v558, 0.0
  %v812 = vadd.f32 %v810, %v811
  %v813 = vsel %vm661, %v563, 0.0
  %v814 = vadd.f32 %v812, %v813
  %v815 = vsel %vm661, %v568, 0.0
  %v816 = vadd.f32 %v814, %v815
  %v817 = vsel %vm661, %v573, 0.0
  %v818 = vadd.f32 %v816, %v817
  %v819 = vsel %vm661, %v578, 0.0
  %v820 = vadd.f32 %v818, %v819
  %v821 = vsel %vm661, %v583, 0.0
  %v822 = vadd.f32 %v820, %v821
  %v823 = vsel %vm661, %v588, 0.0
  %v824 = vadd.f32 %v822, %v823
  %v825 = vsel %vm661, %v593, 0.0
  %v826 = vadd.f32 %v824, %v825
  %v827 = vsel %vm661, %v598, 0.0
  %v828 = vadd.f32 %v826, %v827
  %v829 = vsel %vm661, %v603, 0.0
  %v830 = vadd.f32 %v828, %v829
  %v831 = vsel %vm661, %v608, 0.0
  %v832 = vadd.f32 %v830, %v831
  %v833 = vsel %vm661, %v613, 0.0
  %v834 = vadd.f32 %v832, %v833
  %v835 = vsel %vm661, %v618, 0.0
  %v836 = vadd.f32 %v834, %v835
  %v837 = vsel %vm661, %v623, 0.0
  %v838 = vadd.f32 %v836, %v837
  %v839 = vsel %vm661, %v628, 0.0
  %v840 = vadd.f32 %v838, %v839
  %v841 = vsel %vm661, %v633, 0.0
  %v842 = vadd.f32 %v840, %v841
  %v843 = vsel %vm661, %v638, 0.0
  %v844 = vadd.f32 %v842, %v843
  %v845 = vsel %vm661, %v643, 0.0
  %v846 = vadd.f32 %v844, %v845
  %v847 = vsel %vm661, %v648, 0.0
  %v848 = vadd.f32 %v846, %v847
  %v849 = vsel %vm661, %v653, 0.0
  %v850 = vadd.f32 %v848, %v849
  %v851 = vsel %vm661, %v658, 0.0
  %v852 = vadd.f32 %v850, %v851
  %v853 = vrot.slane %v852, 4
  %v854 = vadd.f32 %v852, %v853
  %v855 = vrot.slane %v854, 2
  %v856 = vadd.f32 %v854, %v855
  %v857 = vrot.slane %v856, 1
  %v858 = vadd.f32 %v856, %v857
  %vm859 = vcmask 57344
  %860 = vst.msk [vmem:[%s3] sm:$0x1] %vm859, %v858
  %v861 = vmul.f32 %v343, %v343
  %v862 = vmul.f32 %v348, %v348
  %v863 = vmul.f32 %v353, %v353
  %v864 = vmul.f32 %v358, %v358
  %v865 = vmul.f32 %v363, %v363
  %v866 = vmul.f32 %v368, %v368
  %v867 = vmul.f32 %v373, %v373
  %v868 = vmul.f32 %v378, %v378
  %v869 = vmul.f32 %v383, %v383
  %v870 = vmul.f32 %v388, %v388
  %v871 = vmul.f32 %v393, %v393
  %v872 = vmul.f32 %v398, %v398
  %v873 = vmul.f32 %v403, %v403
  %v874 = vmul.f32 %v408, %v408
  %v875 = vmul.f32 %v413, %v413
  %v876 = vmul.f32 %v418, %v418
  %v877 = vmul.f32 %v423, %v423
  %v878 = vmul.f32 %v428, %v428
  %v879 = vmul.f32 %v433, %v433
  %v880 = vmul.f32 %v438, %v438
  %v881 = vmul.f32 %v443, %v443
  %v882 = vmul.f32 %v448, %v448
  %v883 = vmul.f32 %v453, %v453
  %v884 = vmul.f32 %v458, %v458
  %v885 = vmul.f32 %v463, %v463
  %v886 = vmul.f32 %v468, %v468
  %v887 = vmul.f32 %v473, %v473
  %v888 = vmul.f32 %v478, %v478
  %v889 = vmul.f32 %v483, %v483
  %v890 = vmul.f32 %v488, %v488
  %v891 = vmul.f32 %v493, %v493
  %v892 = vmul.f32 %v498, %v498
  %v893 = vmul.f32 %v503, %v503
  %v894 = vmul.f32 %v508, %v508
  %v895 = vmul.f32 %v513, %v513
  %v896 = vmul.f32 %v518, %v518
  %v897 = vmul.f32 %v523, %v523
  %v898 = vmul.f32 %v528, %v528
  %v899 = vmul.f32 %v533, %v533
  %v900 = vmul.f32 %v538, %v538
  %v901 = vmul.f32 %v543, %v543
  %v902 = vmul.f32 %v548, %v548
  %v903 = vmul.f32 %v553, %v553
  %v904 = vmul.f32 %v558, %v558
  %v905 = vmul.f32 %v563, %v563
  %v906 = vmul.f32 %v568, %v568
  %v907 = vmul.f32 %v573, %v573
  %v908 = vmul.f32 %v578, %v578
  %v909 = vmul.f32 %v583, %v583
  %v910 = vmul.f32 %v588, %v588
  %v911 = vmul.f32 %v593, %v593
  %v912 = vmul.f32 %v598, %v598
  %v913 = vmul.f32 %v603, %v603
  %v914 = vmul.f32 %v608, %v608
  %v915 = vmul.f32 %v613, %v613
  %v916 = vmul.f32 %v618, %v618
  %v917 = vmul.f32 %v623, %v623
  %v918 = vmul.f32 %v628, %v628
  %v919 = vmul.f32 %v633, %v633
  %v920 = vmul.f32 %v638, %v638
  %v921 = vmul.f32 %v643, %v643
  %v922 = vmul.f32 %v648, %v648
  %v923 = vmul.f32 %v653, %v653
  %v924 = vmul.f32 %v658, %v658
  %v925 = vsel %vm661, %v861, 0.0
  %v926 = vsel %vm661, %v862, 0.0
  %v927 = vadd.f32 %v925, %v926
  %v928 = vsel %vm661, %v863, 0.0
  %v929 = vadd.f32 %v927, %v928
  %v930 = vsel %vm661, %v864, 0.0
  %v931 = vadd.f32 %v929, %v930
  %v932 = vsel %vm661, %v865, 0.0
  %v933 = vadd.f32 %v931, %v932
  %v934 = vsel %vm661, %v866, 0.0
  %v935 = vadd.f32 %v933, %v934
  %v936 = vsel %vm661, %v867, 0.0
  %v937 = vadd.f32 %v935, %v936
  %v938 = vsel %vm661, %v868, 0.0
  %v939 = vadd.f32 %v937, %v938
  %v940 = vsel %vm661, %v869, 0.0
  %v941 = vadd.f32 %v939, %v940
  %v942 = vsel %vm661, %v870, 0.0
  %v943 = vadd.f32 %v941, %v942
  %v944 = vsel %vm661, %v871, 0.0
  %v945 = vadd.f32 %v943, %v944
  %v946 = vsel %vm661, %v872, 0.0
  %v947 = vadd.f32 %v945, %v946
  %v948 = vsel %vm661, %v873, 0.0
  %v949 = vadd.f32 %v947, %v948
  %v950 = vsel %vm661, %v874, 0.0
  %v951 = vadd.f32 %v949, %v950
  %v952 = vsel %vm661, %v875, 0.0
  %v953 = vadd.f32 %v951, %v952
  %v954 = vsel %vm661, %v876, 0.0
  %v955 = vadd.f32 %v953, %v954
  %v956 = vsel %vm661, %v877, 0.0
  %v957 = vadd.f32 %v955, %v956
  %v958 = vsel %vm661, %v878, 0.0
  %v959 = vadd.f32 %v957, %v958
  %v960 = vsel %vm661, %v879, 0.0
  %v961 = vadd.f32 %v959, %v960
  %v962 = vsel %vm661, %v880, 0.0
  %v963 = vadd.f32 %v961, %v962
  %v964 = vsel %vm661, %v881, 0.0
  %v965 = vadd.f32 %v963, %v964
  %v966 = vsel %vm661, %v882, 0.0
  %v967 = vadd.f32 %v965, %v966
  %v968 = vsel %vm661, %v883, 0.0
  %v969 = vadd.f32 %v967, %v968
  %v970 = vsel %vm661, %v884, 0.0
  %v971 = vadd.f32 %v969, %v970
  %v972 = vsel %vm661, %v885, 0.0
  %v973 = vadd.f32 %v971, %v972
  %v974 = vsel %vm661, %v886, 0.0
  %v975 = vadd.f32 %v973, %v974
  %v976 = vsel %vm661, %v887, 0.0
  %v977 = vadd.f32 %v975, %v976
  %v978 = vsel %vm661, %v888, 0.0
  %v979 = vadd.f32 %v977, %v978
  %v980 = vsel %vm661, %v889, 0.0
  %v981 = vadd.f32 %v979, %v980
  %v982 = vsel %vm661, %v890, 0.0
  %v983 = vadd.f32 %v981, %v982
  %v984 = vsel %vm661, %v891, 0.0
  %v985 = vadd.f32 %v983, %v984
  %v986 = vsel %vm661, %v892, 0.0
  %v987 = vadd.f32 %v985, %v986
  %v988 = vsel %vm661, %v893, 0.0
  %v989 = vadd.f32 %v987, %v988
  %v990 = vsel %vm661, %v894, 0.0
  %v991 = vadd.f32 %v989, %v990
  %v992 = vsel %vm661, %v895, 0.0
  %v993 = vadd.f32 %v991, %v992
  %v994 = vsel %vm661, %v896, 0.0
  %v995 = vadd.f32 %v993, %v994
  %v996 = vsel %vm661, %v897, 0.0
  %v997 = vadd.f32 %v995, %v996
  %v998 = vsel %vm661, %v898, 0.0
  %v999 = vadd.f32 %v997, %v998
  %v1000 = vsel %vm661, %v899, 0.0
  %v1001 = vadd.f32 %v999, %v1000
  %v1002 = vsel %vm661, %v900, 0.0
  %v1003 = vadd.f32 %v1001, %v1002
  %v1004 = vsel %vm661, %v901, 0.0
  %v1005 = vadd.f32 %v1003, %v1004
  %v1006 = vsel %vm661, %v902, 0.0
  %v1007 = vadd.f32 %v1005, %v1006
  %v1008 = vsel %vm661, %v903, 0.0
  %v1009 = vadd.f32 %v1007, %v1008
  %v1010 = vsel %vm661, %v904, 0.0
  %v1011 = vadd.f32 %v1009, %v1010
  %v1012 = vsel %vm661, %v905, 0.0
  %v1013 = vadd.f32 %v1011, %v1012
  %v1014 = vsel %vm661, %v906, 0.0
  %v1015 = vadd.f32 %v1013, %v1014
  %v1016 = vsel %vm661, %v907, 0.0
  %v1017 = vadd.f32 %v1015, %v1016
  %v1018 = vsel %vm661, %v908, 0.0
  %v1019 = vadd.f32 %v1017, %v1018
  %v1020 = vsel %vm661, %v909, 0.0
  %v1021 = vadd.f32 %v1019, %v1020
  %v1022 = vsel %vm661, %v910, 0.0
  %v1023 = vadd.f32 %v1021, %v1022
  %v1024 = vsel %vm661, %v911, 0.0
  %v1025 = vadd.f32 %v1023, %v1024
  %v1026 = vsel %vm661, %v912, 0.0
  %v1027 = vadd.f32 %v1025, %v1026
  %v1028 = vsel %vm661, %v913, 0.0
  %v1029 = vadd.f32 %v1027, %v1028
  %v1030 = vsel %vm661, %v914, 0.0
  %v1031 = vadd.f32 %v1029, %v1030
  %v1032 = vsel %vm661, %v915, 0.0
  %v1033 = vadd.f32 %v1031, %v1032
  %v1034 = vsel %vm661, %v916, 0.0
  %v1035 = vadd.f32 %v1033, %v1034
  %v1036 = vsel %vm661, %v917, 0.0
  %v1037 = vadd.f32 %v1035, %v1036
  %v1038 = vsel %vm661, %v918, 0.0
  %v1039 = vadd.f32 %v1037, %v1038
  %v1040 = vsel %vm661, %v919, 0.0
  %v1041 = vadd.f32 %v1039, %v1040
  %v1042 = vsel %vm661, %v920, 0.0
  %v1043 = vadd.f32 %v1041, %v1042
  %v1044 = vsel %vm661, %v921, 0.0
  %v1045 = vadd.f32 %v1043, %v1044
  %v1046 = vsel %vm661, %v922, 0.0
  %v1047 = vadd.f32 %v1045, %v1046
  %v1048 = vsel %vm661, %v923, 0.0
  %v1049 = vadd.f32 %v1047, %v1048
  %v1050 = vsel %vm661, %v924, 0.0
  %v1051 = vadd.f32 %v1049, %v1050
  %v1052 = vrot.slane %v1051, 4
  %v1053 = vadd.f32 %v1051, %v1052
  %v1054 = vrot.slane %v1053, 2
  %v1055 = vadd.f32 %v1053, %v1054
  %v1056 = vrot.slane %v1055, 1
  %v1057 = vadd.f32 %v1055, %v1056
  %1058 = vst.msk [vmem:[%s4] sm:$0x1] %vm859, %v1057
  // Predicated region
  $region10: #{convolutional_forward.2} parent=0 // pred_check
    _
  $region11: #{convolutional_forward.2} parent=0 // pred_check_branch
    %1060 = sbr.rel (0) target = $region13
  $region12: #{convolutional_forward.2} parent=0 // pred_region
    _
  $region13: #{convolutional_forward.2} parent=0 // pred_fallthru
    _
  // Predicated region
  $region14: #{convolutional_forward.2} parent=0 // pred_check
    _
  $region15: #{convolutional_forward.2} parent=0 // pred_check_branch
    %1062 = sbr.rel (0) target = $region17
  $region16: #{convolutional_forward.2} parent=0 // pred_region
    _
  $region17: #{convolutional_forward.2} parent=0 // pred_fallthru
    _
  // Predicated region
  $region18: #{convolutional_forward.2} parent=0 // pred_check
    _
  $region19: #{convolutional_forward.2} parent=0 // pred_check_branch
    %1064 = sbr.rel (0) target = $region21
  $region20: #{convolutional_forward.2} parent=0 // pred_region
    _
  $region21: #{convolutional_forward.2} parent=0 // pred_fallthru
    _
  // Predicated region
  $region22: #{convolutional_forward.2} parent=0 // pred_check
    _
  $region23: #{convolutional_forward.2} parent=0 // pred_check_branch
    %1066 = sbr.rel (0) target = $region25
  $region24: #{convolutional_forward.2} parent=0 // pred_region
    _
  $region25: #{convolutional_forward.2} parent=0 // pred_fallthru
    _
  // Predicated region
  $region26: #{convolutional_forward.2} parent=0 // pred_check
    _
  $region27: #{convolutional_forward.2} parent=0 // pred_check_branch
    %1068 = sbr.rel (0) target = $region29
  $region28: #{convolutional_forward.2} parent=0 // pred_region
    _
  $region29: #{convolutional_forward.2} parent=0 // pred_fallthru
    _
  // Predicated region
  $region30: #{convolutional_forward.2} parent=0 // pred_check
    _
  $region31: #{convolutional_forward.2} parent=0 // pred_check_branch
    %1070 = sbr.rel (0) target = $region33
  $region32: #{convolutional_forward.2} parent=0 // pred_region
    _
  $region33: #{convolutional_forward.2} parent=0 // pred_fallthru
    _

</llo_original>
